<compile_context>
chip_gen: v6e
topology: v6e:2x2x1
jax: 0.10.0
libtpu: 0.0.40
codegen_flags: <defaults>
</compile_context>

<pallas_src>
import functools

import jax
import jax.numpy as jnp
import numpy as np
from jax.experimental import pallas as pl
from jax.experimental.pallas import tpu as pltpu


def _round_up(x, m):
    return ((x + m - 1) // m) * m


def _bpr_loss_kernel(u_ref, i_ref, j_ref,        # VMEM: (TB, D) f32 chunks
                     out_ref,                    # SMEM: (1, 1) f32
                     logsig_acc, reg_acc,        # VMEM scratch: (TB, 1) f32
                     *, batch, tb, weight_decay, use_reg):
    c = pl.program_id(0)

    @pl.when(c == 0)
    def _init():
        logsig_acc[...] = jnp.zeros_like(logsig_acc)
        reg_acc[...] = jnp.zeros_like(reg_acc)

    u = u_ref[...]
    i = i_ref[...]
    j = j_ref[...]

    # x_uij = <u, i> - <u, j> = <u, i - j>          -> (TB, 1)
    x_uij = jnp.sum(u * (i - j), axis=-1, keepdims=True)

    # Single-path numerically stable logsigmoid:
    #   logsigmoid(x) = -(max(-x, 0) + log1p(exp(-|x|)))
    logsig = -(jnp.maximum(-x_uij, 0.0) + jnp.log1p(jnp.exp(-jnp.abs(x_uij))))

    # Mask out batch-padding rows.
    row = c * tb + jax.lax.broadcasted_iota(jnp.int32, (tb, 1), 0)
    valid = row < batch

    logsig_acc[...] += jnp.where(valid, logsig, 0.0)

    if use_reg:
        reg = jnp.sum(u * u + i * i + j * j, axis=-1, keepdims=True)
        reg_acc[...] += jnp.where(valid, reg, 0.0)

    @pl.when(c == pl.num_programs(0) - 1)
    def _finalize():
        loss = -jnp.sum(logsig_acc[...])
        if use_reg:
            loss = loss + jnp.float32(weight_decay) * jnp.sum(reg_acc[...])
        out_ref[0, 0] = loss


def bpr_forward(u_idx, i_idx, j_idx, W, H, W_layers, H_layers,
                weight_decay, reg_type, tb=256):
    """BPR forward loss.

    u_idx, i_idx, j_idx : int32 [B]
    W : f32 [user_size, dim]   (user embedding table)
    H : f32 [item_size, dim]   (item embedding table)
    W_layers / H_layers : list of (weight[dim, dim], bias[dim]) Linear stacks
        applied to the gathered embedding rows (empty when layer_num == 0).
    """
    u_idx = u_idx.astype(jnp.int32)
    i_idx = i_idx.astype(jnp.int32)
    j_idx = j_idx.astype(jnp.int32)

    batch = u_idx.shape[0]
    dim = W.shape[1]

    # Gather only the needed rows; tables stay HBM-resident under XLA.
    u_emb = jnp.take(W, u_idx, axis=0).astype(jnp.float32)
    i_emb = jnp.take(H, i_idx, axis=0).astype(jnp.float32)
    j_emb = jnp.take(H, j_idx, axis=0).astype(jnp.float32)

    # Apply the (linear) layer stacks to the gathered rows only.
    for wgt, b in W_layers:
        u_emb = u_emb @ wgt.T + b
    for wgt, b in H_layers:
        i_emb = i_emb @ wgt.T + b
        j_emb = j_emb @ wgt.T + b

    # Chunk the batch; pad to a multiple of the tile.
    tb = min(tb, _round_up(batch, 8))
    b_pad = _round_up(batch, tb)
    if b_pad != batch:
        pad = b_pad - batch
        u_emb = jnp.pad(u_emb, ((0, pad), (0, 0)))
        i_emb = jnp.pad(i_emb, ((0, pad), (0, 0)))
        j_emb = jnp.pad(j_emb, ((0, pad), (0, 0)))
    num_chunks = b_pad // tb

    use_reg = (reg_type != 'all')
    kernel = functools.partial(_bpr_loss_kernel,
                               batch=batch, tb=tb,
                               weight_decay=float(weight_decay),
                               use_reg=use_reg)

    emb_spec = pl.BlockSpec((tb, dim), lambda c: (c, 0))

    out = pl.pallas_call(
        kernel,
        out_shape=jax.ShapeDtypeStruct((1, 1), jnp.float32),
        grid_spec=pltpu.PrefetchScalarGridSpec(
            num_scalar_prefetch=0,
            grid=(num_chunks,),
            in_specs=[emb_spec, emb_spec, emb_spec],
            out_specs=pl.BlockSpec(memory_space=pltpu.MemorySpace.SMEM),
            scratch_shapes=[pltpu.VMEM((tb, 1), jnp.float32),
                            pltpu.VMEM((tb, 1), jnp.float32)],
        ),
        compiler_params=pltpu.CompilerParams(
            dimension_semantics=("arbitrary",)),
    )(u_emb, i_emb, j_emb)
    return out[0, 0]


def bpr_forward_ref(u_idx, i_idx, j_idx, W, H, W_layers, H_layers,
                    weight_decay, reg_type):
    """Pure-JAX reference mirroring the PyTorch forward."""
    u_emb = W[u_idx]
    for wgt, b in W_layers:
        u_emb = u_emb @ wgt.T + b
    i_emb = H[i_idx]
    j_emb = H[j_idx]
    for wgt, b in H_layers:
        i_emb = i_emb @ wgt.T + b
        j_emb = j_emb @ wgt.T + b
    x_ui = jnp.sum(u_emb * i_emb, axis=1)
    x_uj = jnp.sum(u_emb * j_emb, axis=1)
    x_uij = x_ui - x_uj
    log_prob = jnp.sum(jax.nn.log_sigmoid(x_uij))
    out = -log_prob
    if reg_type != 'all':
        out = out + weight_decay * (jnp.sum(u_emb ** 2)
                                    + jnp.sum(i_emb ** 2)
                                    + jnp.sum(j_emb ** 2))
    return out


if __name__ == "__main__":
    # Module hyper-parameters (small, consistent with the nn.Module __init__).
    user_size = 64
    item_size = 128
    dim = 128
    weight_decay = 0.001
    layer_num = 0          # module default; Sequential of 0 Linear layers
    reg_type = 'part'      # module default -> regularization term included
    batch = 300            # > tile -> exercises the grid and padding mask

    key = jax.random.PRNGKey(0)
    k_w, k_h, k_u, k_i, k_j = jax.random.split(key, 5)

    # nn.init.normal_(weight, 0, 0.01)
    W = 0.01 * jax.random.normal(k_w, (user_size, dim), dtype=jnp.float32)
    H = 0.01 * jax.random.normal(k_h, (item_size, dim), dtype=jnp.float32)

    # layer_num == 0 -> empty Linear stacks (applied to gathered rows if set).
    W_layers = []
    H_layers = []

    u = jax.random.randint(k_u, (batch,), 0, user_size, dtype=jnp.int32)
    i = jax.random.randint(k_i, (batch,), 0, item_size, dtype=jnp.int32)
    j = jax.random.randint(k_j, (batch,), 0, item_size, dtype=jnp.int32)

    loss = bpr_forward(u, i, j, W, H, W_layers, H_layers,
                       weight_decay, reg_type)
    loss = jax.block_until_ready(loss)

    ref = bpr_forward_ref(u, i, j, W, H, W_layers, H_layers,
                          weight_decay, reg_type)
    ref = jax.block_until_ready(ref)

    np.testing.assert_allclose(np.asarray(loss), np.asarray(ref),
                               rtol=1e-5, atol=1e-5)
    print("KERNEL_OK")
</pallas_src>

<mosaic_0001>
module attributes {stable_mosaic.version = 11 : i64} {
  func.func @_bpr_loss_kernel(%arg0: i32, %arg1: memref<256x128xf32, #tpu.memory_space<vmem>>, %arg2: memref<256x128xf32, #tpu.memory_space<vmem>>, %arg3: memref<256x128xf32, #tpu.memory_space<vmem>>, %arg4: memref<1x1xf32, #tpu.memory_space<smem>>, %arg5: memref<256x1xf32, #tpu.memory_space<vmem>>, %arg6: memref<256x1xf32, #tpu.memory_space<vmem>>) attributes {dimension_semantics = [#tpu.dimension_semantics<arbitrary>], iteration_bounds = array<i64: 2>, scalar_prefetch = 0 : i64, scratch_operands = 2 : i64, tpu.core_type = #tpu.core_type<tc>, window_params = [{transform_indices = @transform_0, window_bounds = array<i64: 256, 128>}, {transform_indices = @transform_1, window_bounds = array<i64: 256, 128>}, {transform_indices = @transform_2, window_bounds = array<i64: 256, 128>}, {transform_indices = @transform_3, window_bounds = array<i64: 1, 1>}]} {
    %c0_i32 = arith.constant 0 : i32
    %0 = arith.cmpi eq, %arg0, %c0_i32 : i32
    %1 = arith.extui %0 : i1 to i32
    %c0_i32_0 = arith.constant 0 : i32
    %2 = arith.cmpi ne, %1, %c0_i32_0 : i32
    scf.if %2 {
      %cst_22 = arith.constant 0.000000e+00 : f32
      %48 = vector.broadcast %cst_22 : f32 to vector<256x1xf32>
      %c0_23 = arith.constant 0 : index
      %c0_24 = arith.constant 0 : index
      %49 = vector.load %arg5[%c0_23, %c0_24] : memref<256x1xf32, #tpu.memory_space<vmem>>, vector<256x1xf32>
      tpu.vector_store %arg5[%c0_23, %c0_24], %48 {strides = array<i32>} : memref<256x1xf32, #tpu.memory_space<vmem>>, vector<256x1xf32>,
      %cst_25 = arith.constant 0.000000e+00 : f32
      %50 = vector.broadcast %cst_25 : f32 to vector<256x1xf32>
      %c0_26 = arith.constant 0 : index
      %c0_27 = arith.constant 0 : index
      %51 = vector.load %arg6[%c0_26, %c0_27] : memref<256x1xf32, #tpu.memory_space<vmem>>, vector<256x1xf32>
      tpu.vector_store %arg6[%c0_26, %c0_27], %50 {strides = array<i32>} : memref<256x1xf32, #tpu.memory_space<vmem>>, vector<256x1xf32>,
    } else {
    }
    %c0 = arith.constant 0 : index
    %c0_1 = arith.constant 0 : index
    %3 = vector.load %arg1[%c0, %c0_1] : memref<256x128xf32, #tpu.memory_space<vmem>>, vector<256x128xf32>
    %c0_2 = arith.constant 0 : index
    %c0_3 = arith.constant 0 : index
    %4 = vector.load %arg2[%c0_2, %c0_3] : memref<256x128xf32, #tpu.memory_space<vmem>>, vector<256x128xf32>
    %c0_4 = arith.constant 0 : index
    %c0_5 = arith.constant 0 : index
    %5 = vector.load %arg3[%c0_4, %c0_5] : memref<256x128xf32, #tpu.memory_space<vmem>>, vector<256x128xf32>
    %6 = arith.subf %4, %5 : vector<256x128xf32>
    %7 = arith.mulf %3, %6 : vector<256x128xf32>
    %cst = arith.constant dense<0.000000e+00> : vector<256xf32>
    %8 = vector.multi_reduction <add>, %7, %cst [1] : vector<256x128xf32> to vector<256xf32>
    %9 = vector.shape_cast %8 : vector<256xf32> to vector<256x1xf32>
    %cst_6 = arith.constant 0.000000e+00 : f32
    %10 = vector.broadcast %cst_6 : f32 to vector<256x1xf32>
    %11 = arith.subf %10, %9 : vector<256x1xf32>
    %cst_7 = arith.constant 0.000000e+00 : f32
    %12 = vector.broadcast %cst_7 : f32 to vector<256x1xf32>
    %13 = arith.maximumf %11, %12 : vector<256x1xf32>
    %14 = math.absf %9 : vector<256x1xf32>
    %cst_8 = arith.constant 0.000000e+00 : f32
    %15 = vector.broadcast %cst_8 : f32 to vector<256x1xf32>
    %16 = arith.subf %15, %14 : vector<256x1xf32>
    %17 = math.exp %16 : vector<256x1xf32>
    %18 = math.log1p %17 : vector<256x1xf32>
    %19 = arith.addf %13, %18 : vector<256x1xf32>
    %cst_9 = arith.constant 0.000000e+00 : f32
    %20 = vector.broadcast %cst_9 : f32 to vector<256x1xf32>
    %21 = arith.subf %20, %19 : vector<256x1xf32>
    %c256_i32 = arith.constant 256 : i32
    %22 = arith.muli %arg0, %c256_i32 : i32
    %23 = tpu.iota {dimensions = array<i32: 0>} : vector<256x1xi32>
    %24 = vector.broadcast %22 : i32 to vector<256x1xi32>
    %25 = arith.addi %24, %23 : vector<256x1xi32>
    %c300_i32 = arith.constant 300 : i32
    %26 = vector.broadcast %c300_i32 : i32 to vector<256x1xi32>
    %27 = arith.cmpi slt, %25, %26 : vector<256x1xi32>
    %c0_10 = arith.constant 0 : index
    %c0_11 = arith.constant 0 : index
    %28 = vector.load %arg5[%c0_10, %c0_11] : memref<256x1xf32, #tpu.memory_space<vmem>>, vector<256x1xf32>
    %cst_12 = arith.constant 0.000000e+00 : f32
    %29 = vector.broadcast %cst_12 : f32 to vector<256x1xf32>
    %30 = arith.select %27, %21, %29 : vector<256x1xi1>, vector<256x1xf32>
    %31 = arith.addf %28, %30 : vector<256x1xf32>
    %c0_13 = arith.constant 0 : index
    %c0_14 = arith.constant 0 : index
    %32 = vector.load %arg5[%c0_13, %c0_14] : memref<256x1xf32, #tpu.memory_space<vmem>>, vector<256x1xf32>
    tpu.vector_store %arg5[%c0_13, %c0_14], %31 {strides = array<i32>} : memref<256x1xf32, #tpu.memory_space<vmem>>, vector<256x1xf32>,
    %33 = arith.mulf %3, %3 : vector<256x128xf32>
    %34 = arith.mulf %4, %4 : vector<256x128xf32>
    %35 = arith.addf %33, %34 : vector<256x128xf32>
    %36 = arith.mulf %5, %5 : vector<256x128xf32>
    %37 = arith.addf %35, %36 : vector<256x128xf32>
    %cst_15 = arith.constant dense<0.000000e+00> : vector<256xf32>
    %38 = vector.multi_reduction <add>, %37, %cst_15 [1] : vector<256x128xf32> to vector<256xf32>
    %39 = vector.shape_cast %38 : vector<256xf32> to vector<256x1xf32>
    %c0_16 = arith.constant 0 : index
    %c0_17 = arith.constant 0 : index
    %40 = vector.load %arg6[%c0_16, %c0_17] : memref<256x1xf32, #tpu.memory_space<vmem>>, vector<256x1xf32>
    %cst_18 = arith.constant 0.000000e+00 : f32
    %41 = vector.broadcast %cst_18 : f32 to vector<256x1xf32>
    %42 = arith.select %27, %39, %41 : vector<256x1xi1>, vector<256x1xf32>
    %43 = arith.addf %40, %42 : vector<256x1xf32>
    %c0_19 = arith.constant 0 : index
    %c0_20 = arith.constant 0 : index
    %44 = vector.load %arg6[%c0_19, %c0_20] : memref<256x1xf32, #tpu.memory_space<vmem>>, vector<256x1xf32>
    tpu.vector_store %arg6[%c0_19, %c0_20], %43 {strides = array<i32>} : memref<256x1xf32, #tpu.memory_space<vmem>>, vector<256x1xf32>,
    %c1_i32 = arith.constant 1 : i32
    %45 = arith.cmpi eq, %arg0, %c1_i32 : i32
    %46 = arith.extui %45 : i1 to i32
    %c0_i32_21 = arith.constant 0 : i32
    %47 = arith.cmpi ne, %46, %c0_i32_21 : i32
    scf.if %47 {
      %c0_22 = arith.constant 0 : index
      %c0_23 = arith.constant 0 : index
      %48 = vector.load %arg5[%c0_22, %c0_23] : memref<256x1xf32, #tpu.memory_space<vmem>>, vector<256x1xf32>
      %49 = vector.shape_cast %48 : vector<256x1xf32> to vector<1x256x1xf32>
      %cst_24 = arith.constant dense<0.000000e+00> : vector<1xf32>
      %50 = vector.multi_reduction <add>, %49, %cst_24 [1, 2] : vector<1x256x1xf32> to vector<1xf32>
      %51 = vector.shape_cast %50 : vector<1xf32> to vector<1x1x1xf32>
      %52 = vector.extract %51[0, 0, 0] : f32 from vector<1x1x1xf32>
      %cst_25 = arith.constant 0.000000e+00 : f32
      %53 = arith.subf %cst_25, %52 : f32
      %c0_26 = arith.constant 0 : index
      %c0_27 = arith.constant 0 : index
      %54 = vector.load %arg6[%c0_26, %c0_27] : memref<256x1xf32, #tpu.memory_space<vmem>>, vector<256x1xf32>
      %55 = vector.shape_cast %54 : vector<256x1xf32> to vector<1x256x1xf32>
      %cst_28 = arith.constant dense<0.000000e+00> : vector<1xf32>
      %56 = vector.multi_reduction <add>, %55, %cst_28 [1, 2] : vector<1x256x1xf32> to vector<1xf32>
      %57 = vector.shape_cast %56 : vector<1xf32> to vector<1x1x1xf32>
      %58 = vector.extract %57[0, 0, 0] : f32 from vector<1x1x1xf32>
      %cst_29 = arith.constant 1.000000e-03 : f32
      %59 = arith.mulf %cst_29, %58 : f32
      %60 = arith.addf %53, %59 : f32
      %c0_30 = arith.constant 0 : index
      %c0_31 = arith.constant 0 : index
      %61 = memref.load %arg4[%c0_30, %c0_31] : memref<1x1xf32, #tpu.memory_space<smem>>
      memref.store %60, %arg4[%c0_30, %c0_31] : memref<1x1xf32, #tpu.memory_space<smem>>
    } else {
    }
    return
  }
  func.func @transform_0(%arg0: i32) -> (i32, i32) {
    %c0_i32 = arith.constant 0 : i32
    %c0_i32_0 = arith.constant 0 : i32
    return %arg0, %c0_i32 : i32, i32
  }
  func.func @transform_1(%arg0: i32) -> (i32, i32) {
    %c0_i32 = arith.constant 0 : i32
    %c0_i32_0 = arith.constant 0 : i32
    return %arg0, %c0_i32 : i32, i32
  }
  func.func @transform_2(%arg0: i32) -> (i32, i32) {
    %c0_i32 = arith.constant 0 : i32
    %c0_i32_0 = arith.constant 0 : i32
    return %arg0, %c0_i32 : i32, i32
  }
  func.func @transform_3(%arg0: i32) -> (i32, i32) {
    %c0_i32 = arith.constant 0 : i32
    %c0_i32_0 = arith.constant 0 : i32
    %c0_i32_1 = arith.constant 0 : i32
    return %c0_i32, %c0_i32_0 : i32, i32
  }
}

</mosaic_0001>

<llo_original>
// kernel: tpu_custom_call.1
$region0: #{tpu_custom_call.1}
  #allocation0 [shape = 'u32[]', space=smem, size = 0x4, offset = 0x4, fixed_abs, tag = 'smem constant byte address 0x4 - core index']
  #allocation1 [shape = 'u32[144,128]{1,0:T(1,128)}', space=vmem, size = 0x12000, scoped, tag = 'internal scratch']
  #allocation2 [shape = 'f32[256,1]{1,0:T(8,128)}', space=vmem, size = 0x20000, scoped, tag = 'scratch operand']
  #allocation3 [shape = 'f32[256,1]{1,0:T(8,128)}', space=vmem, size = 0x20000, scoped, tag = 'scratch operand']
  %s0 = inlined_call_operand.hbm [shape: f32[512,128], index: 0, kind: input, shape index: {}]
  %s1 = inlined_call_operand.hbm [shape: f32[512,128], index: 1, kind: input, shape index: {}]
  %s2 = inlined_call_operand.hbm [shape: f32[512,128], index: 2, kind: input, shape index: {}]
  %s3 = inlined_call_operand.hbm [shape: f32[1,1], index: 3, kind: output, shape index: {}]
  %s4 = sld [smem:[#allocation0]]
  $region65: #{tpu_custom_call.1} parent=0
    _
  %s6 = ssub.s32 1, %s4
  %s7 = scalar_select 0, %s6, %s4
  $region1: #{tpu_custom_call.1} parent=0
    #allocation4 [shape = 'u8[262144]{0}', space=vmem, size = 0x40000, scoped, tag = 'input window, operand 0']
    #allocation5 [shape = 's32[2]{0}', space=sflag, size = 0x8, scoped, tag = 'scoped memory for tpu_custom_call.1']
    #allocation6 [shape = 's32[2]{0}', space=sflag, size = 0x8, scoped, tag = 'scoped memory for tpu_custom_call.1']
    #allocation7 [shape = 'u8[262144]{0}', space=vmem, size = 0x40000, scoped, tag = 'input window, operand 1']
    #allocation8 [shape = 's32[2]{0}', space=sflag, size = 0x8, scoped, tag = 'scoped memory for tpu_custom_call.1']
    #allocation9 [shape = 'u8[262144]{0}', space=vmem, size = 0x40000, scoped, tag = 'input window, operand 2']
    #allocation10 [shape = 'u8[512]{0}', space=smem, size = 0x200, scoped, tag = 'output window, operand 0, single buffered']
    %8 = vsyncpa [#allocation5], 0
    %s9 = scalar_lea.sflag [#allocation5], 1
    %10 = vsyncpa %s9, 0
    %11 = vsyncpa [#allocation8], 0
    %s12 = scalar_lea.sflag [#allocation8], 1
    %13 = vsyncpa %s12, 0
    %14 = vsyncpa [#allocation6], 0
    loop: start=0, step=1, limit=4
    $region2: #{tpu_custom_call.1} parent=1 // loop_pre_header
      _
    $region3: #{tpu_custom_call.1} parent=1 // loop_header
      %s16 = sphi 0, %s20
      %p17 = scmp.ge.s32.totalorder %s16, 4
      %s26 = sphi 0, %s28
      %s29 = sphi 0, %s26
      %s30 = sphi 0, %s29
      %s46 = sphi 0, %s30
      %s52 = sphi 0, %s54
      %s55 = sphi 0, %s52
      %s56 = sphi 0, %s55
      %s72 = sphi 0, %s56
      %s78 = sphi 0, %s80
      %s81 = sphi 0, %s78
      %s82 = sphi 0, %s81
      %s98 = sphi 0, %s82
      %s102 = sphi 0, %s102
      %s104 = sphi 0, %s102
      %s105 = sphi 0, %s104
      %s119 = sphi 0, %s105
    $region4: #{tpu_custom_call.1} parent=1 // loop_header_branch
      %19 = sbr.rel (%p17) target = $region8
    $region5: #{tpu_custom_call.1} parent=1 // loop_body
      %s21 = ssub.s32 %s16, 1
      %s22 = ssub.s32 %s16, 2
      %s23 = sadd.s32 %s16, 1
      %s24 = ssub.s32 %s16, %s23
      %p25 = scmp.eq.s32.totalorder %s24, 0
      %s27 = sadd.s32 %s26, 1
      %s28 = scalar_select %p25, %s26, %s27
      %p31 = pneg %p25
      %p32 = scmp.eq.s32.totalorder %s16, 1
      %p33 = por %p31, %p32
      %p34 = scmp.ne.s32.totalorder %s26, %s29
      %p35 = scmp.eq.s32.totalorder %s16, 0
      %p36 = por %p34, %p35
      %p37 = scmp.ne.s32.totalorder %s26, %s29
      %p38 = scmp.eq.s32.totalorder %s21, 1
      %p39 = por %p37, %p38
      %p40 = scmp.ne.s32.totalorder %s29, %s30
      %p41 = scmp.eq.s32.totalorder %s21, 0
      %p42 = por %p40, %p41
      %p43 = scmp.ne.s32.totalorder %s29, %s30
      %p44 = scmp.eq.s32.totalorder %s22, 1
      %p45 = por %p43, %p44
      %p47 = scmp.ne.s32.totalorder %s30, %s46
      %p48 = scmp.eq.s32.totalorder %s22, 0
      %p49 = por %p47, %p48
      %s50 = ssub.s32 %s16, %s23
      %p51 = scmp.eq.s32.totalorder %s50, 0
      %s53 = sadd.s32 %s52, 1
      %s54 = scalar_select %p51, %s52, %s53
      %p57 = pneg %p51
      %p58 = scmp.eq.s32.totalorder %s16, 1
      %p59 = por %p57, %p58
      %p60 = scmp.ne.s32.totalorder %s52, %s55
      %p61 = scmp.eq.s32.totalorder %s16, 0
      %p62 = por %p60, %p61
      %p63 = scmp.ne.s32.totalorder %s52, %s55
      %p64 = scmp.eq.s32.totalorder %s21, 1
      %p65 = por %p63, %p64
      %p66 = scmp.ne.s32.totalorder %s55, %s56
      %p67 = scmp.eq.s32.totalorder %s21, 0
      %p68 = por %p66, %p67
      %p69 = scmp.ne.s32.totalorder %s55, %s56
      %p70 = scmp.eq.s32.totalorder %s22, 1
      %p71 = por %p69, %p70
      %p73 = scmp.ne.s32.totalorder %s56, %s72
      %p74 = scmp.eq.s32.totalorder %s22, 0
      %p75 = por %p73, %p74
      %s76 = ssub.s32 %s16, %s23
      %p77 = scmp.eq.s32.totalorder %s76, 0
      %s79 = sadd.s32 %s78, 1
      %s80 = scalar_select %p77, %s78, %s79
      %p83 = pneg %p77
      %p84 = scmp.eq.s32.totalorder %s16, 1
      %p85 = por %p83, %p84
      %p86 = scmp.ne.s32.totalorder %s78, %s81
      %p87 = scmp.eq.s32.totalorder %s16, 0
      %p88 = por %p86, %p87
      %p89 = scmp.ne.s32.totalorder %s78, %s81
      %p90 = scmp.eq.s32.totalorder %s21, 1
      %p91 = por %p89, %p90
      %p92 = scmp.ne.s32.totalorder %s81, %s82
      %p93 = scmp.eq.s32.totalorder %s21, 0
      %p94 = por %p92, %p93
      %p95 = scmp.ne.s32.totalorder %s81, %s82
      %p96 = scmp.eq.s32.totalorder %s22, 1
      %p97 = por %p95, %p96
      %p99 = scmp.ne.s32.totalorder %s82, %s98
      %p100 = scmp.eq.s32.totalorder %s22, 0
      %p101 = por %p99, %p100
      %s103 = sadd.s32 %s102, 1
      %p106 = scmp.eq.s32.totalorder %s16, 1
      %p107 = scmp.ne.s32.totalorder %s102, %s104
      %p108 = scmp.eq.s32.totalorder %s16, 0
      %p109 = por %p107, %p108
      %p110 = scmp.ne.s32.totalorder %s102, %s104
      %p111 = scmp.eq.s32.totalorder %s21, 1
      %p112 = por %p110, %p111
      %p113 = scmp.ne.s32.totalorder %s104, %s105
      %p114 = scmp.eq.s32.totalorder %s21, 0
      %p115 = por %p113, %p114
      %p116 = scmp.ne.s32.totalorder %s104, %s105
      %p117 = scmp.eq.s32.totalorder %s22, 1
      %p118 = por %p116, %p117
      %p120 = scmp.ne.s32.totalorder %s105, %s119
      %p121 = scmp.eq.s32.totalorder %s22, 0
      %p122 = por %p120, %p121
      %p123 = scmp.le.s32.totalorder 1, %s16
      %p124 = scmp.lt.s32.totalorder %s16, 3
      %p125 = pnand %p123, %p124
      %p126 = pneg %p125
      // Predicated region
      $region9: #{tpu_custom_call.1} parent=5 // pred_check
        _
      $region10: #{tpu_custom_call.1} parent=5 // pred_check_branch
        %128 = sbr.rel (%p125) target = $region12
      $region11: #{tpu_custom_call.1} parent=5 // pred_region
        %s129 = ssub.s32 %s16, 1
      $region12: #{tpu_custom_call.1} parent=5 // pred_fallthru
        _
      %p130 = scmp.lt.s32.totalorder %s16, 2
      // Predicated region
      $region13: #{tpu_custom_call.1} parent=5 // pred_check
        %p131 = pneg %p130
      $region14: #{tpu_custom_call.1} parent=5 // pred_check_branch
        %133 = sbr.rel (%p131) target = $region16
      $region15: #{tpu_custom_call.1} parent=5 // pred_region
        // Predicated region
        $region17: #{tpu_custom_call.1} parent=15 // pred_check
          %p134 = pneg %p36
        $region18: #{tpu_custom_call.1} parent=15 // pred_check_branch
          %136 = sbr.rel (%p134) target = $region20
        $region19: #{tpu_custom_call.1} parent=15 // pred_region
          %s137 = sand.u32 %s26, 1
          %s138 = scalar_lea.sflag [#allocation5], %s137
          %s139 = sand.u32 %s26, 1
          %s140 = smul.addr %s139, 256
          %s141 = scalar_lea.vmem [#allocation4], %s140
          %s142 = smul.u32 32, %s16
          %s144 = ssub.s32 4096, 4096
          %145 = vsyncadd %s138, %s144
          %s146 = smul.addr %s142, 128
          %s147 = scalar_lea.hbm %s0, %s146
          %s148 = sshll.u32 %s141, 4
          %s149 = int_to_ptr.vmem [resolvable:$true] %s148
          %154 = dma.hbm_to_vmem [thread:$0]  %s147, 4096, %s149, %s138, 128, 128, 8
        $region20: #{tpu_custom_call.1} parent=15 // pred_fallthru
          _
        // Predicated region
        $region21: #{tpu_custom_call.1} parent=15 // pred_check
          %p155 = pneg %p62
        $region22: #{tpu_custom_call.1} parent=15 // pred_check_branch
          %157 = sbr.rel (%p155) target = $region24
        $region23: #{tpu_custom_call.1} parent=15 // pred_region
          %s158 = sand.u32 %s16, 1
          %s159 = scalar_lea.sflag [#allocation8], %s158
          %s160 = sand.u32 %s52, 1
          %s161 = smul.addr %s160, 256
          %s162 = scalar_lea.vmem [#allocation7], %s161
          %s163 = smul.u32 32, %s16
          %s165 = ssub.s32 4096, 4096
          %166 = vsyncadd %s159, %s165
          %s167 = smul.addr %s163, 128
          %s168 = scalar_lea.hbm %s1, %s167
          %s169 = sshll.u32 %s162, 4
          %s170 = int_to_ptr.vmem [resolvable:$true] %s169
          %175 = dma.hbm_to_vmem [thread:$0]  %s168, 4096, %s170, %s159, 128, 128, 8
        $region24: #{tpu_custom_call.1} parent=15 // pred_fallthru
          _
        // Predicated region
        $region25: #{tpu_custom_call.1} parent=15 // pred_check
          %p176 = pneg %p88
        $region26: #{tpu_custom_call.1} parent=15 // pred_check_branch
          %178 = sbr.rel (%p176) target = $region28
        $region27: #{tpu_custom_call.1} parent=15 // pred_region
          %s179 = sand.u32 %s16, 1
          %s180 = scalar_lea.sflag [#allocation8], %s179
          %s181 = sand.u32 %s78, 1
          %s182 = smul.addr %s181, 256
          %s183 = scalar_lea.vmem [#allocation9], %s182
          %s184 = smul.u32 32, %s16
          %s186 = ssub.s32 4096, 4096
          %187 = vsyncadd %s180, %s186
          %s188 = smul.addr %s184, 128
          %s189 = scalar_lea.hbm %s2, %s188
          %s190 = sshll.u32 %s183, 4
          %s191 = int_to_ptr.vmem [resolvable:$true] %s190
          %196 = dma.hbm_to_vmem [thread:$0]  %s189, 4096, %s191, %s180, 128, 128, 8
        $region28: #{tpu_custom_call.1} parent=15 // pred_fallthru
          _
      $region16: #{tpu_custom_call.1} parent=5 // pred_fallthru
        _
      %p197 = scmp.le.s32.totalorder 1, %s16
      %p198 = scmp.lt.s32.totalorder %s16, 3
      %p199 = pnand %p197, %p198
      %p200 = pneg %p199
      // Predicated region
      $region29: #{tpu_custom_call.1} parent=5 // pred_check
        _
      $region30: #{tpu_custom_call.1} parent=5 // pred_check_branch
        %202 = sbr.rel (%p199) target = $region32
      $region31: #{tpu_custom_call.1} parent=5 // pred_region
        %s203 = ssub.s32 %s16, 1
        %s204 = sand.u32 %s29, 1
        %s205 = scalar_lea.sflag [#allocation5], %s204
        %s206 = sand.u32 %s29, 1
        %s207 = smul.addr %s206, 256
        %s208 = scalar_lea.vmem [#allocation4], %s207
        // Predicated region
        $region33: #{tpu_custom_call.1} parent=31 // pred_check
          %p209 = pneg %p42
        $region34: #{tpu_custom_call.1} parent=31 // pred_check_branch
          %211 = sbr.rel (%p209) target = $region36
        $region35: #{tpu_custom_call.1} parent=31 // pred_region
          %212 = dma.done %s205, 4096
        $region36: #{tpu_custom_call.1} parent=31 // pred_fallthru
          _
        %s213 = sand.u32 %s21, 1
        %s214 = scalar_lea.sflag [#allocation8], %s213
        %s215 = sand.u32 %s55, 1
        %s216 = smul.addr %s215, 256
        %s217 = scalar_lea.vmem [#allocation7], %s216
        // Predicated region
        $region37: #{tpu_custom_call.1} parent=31 // pred_check
          %p218 = pneg %p68
        $region38: #{tpu_custom_call.1} parent=31 // pred_check_branch
          %220 = sbr.rel (%p218) target = $region40
        $region39: #{tpu_custom_call.1} parent=31 // pred_region
          %221 = dma.done %s214, 4096
        $region40: #{tpu_custom_call.1} parent=31 // pred_fallthru
          _
        %s222 = sand.u32 %s21, 1
        %s223 = scalar_lea.sflag [#allocation8], %s222
        %s224 = sand.u32 %s81, 1
        %s225 = smul.addr %s224, 256
        %s226 = scalar_lea.vmem [#allocation9], %s225
        // Predicated region
        $region41: #{tpu_custom_call.1} parent=31 // pred_check
          %p227 = pneg %p94
        $region42: #{tpu_custom_call.1} parent=31 // pred_check_branch
          %229 = sbr.rel (%p227) target = $region44
        $region43: #{tpu_custom_call.1} parent=31 // pred_region
          %230 = dma.done %s223, 4096
        $region44: #{tpu_custom_call.1} parent=31 // pred_fallthru
          _
        %s231 = sand.u32 %s29, 1
        %s232 = scalar_lea.sflag [#allocation5], %s231
        %s233 = sand.u32 %s29, 1
        %s234 = smul.addr %s233, 256
        %s235 = scalar_lea.vmem [#allocation4], %s234
        %p236 = pneg %p42
        %p237 = pneg %p39
        %s238 = sand.u32 %s21, 1
        %s239 = scalar_lea.sflag [#allocation8], %s238
        %s240 = sand.u32 %s55, 1
        %s241 = smul.addr %s240, 256
        %s242 = scalar_lea.vmem [#allocation7], %s241
        %p243 = pneg %p68
        %p244 = pneg %p65
        %s245 = sand.u32 %s21, 1
        %s246 = scalar_lea.sflag [#allocation8], %s245
        %s247 = sand.u32 %s81, 1
        %s248 = smul.addr %s247, 256
        %s249 = scalar_lea.vmem [#allocation9], %s248
        %p250 = pneg %p94
        %p251 = pneg %p91
        %p252 = pneg %p115
        %p253 = pneg %p112
        %s254 = smul.u32 32, %s21
        %s255 = smul.u32 32, %s21
        %s256 = smul.u32 32, %s21
        %p257 = scmp.eq.s32.totalorder %s21, 0
        // Predicated region
        $region45: #{tpu_custom_call.1} parent=31 // pred_check
          %p258 = pneg %p257
        $region46: #{tpu_custom_call.1} parent=31 // pred_check_branch
          %260 = sbr.rel (%p258) target = $region48
        $region47: #{tpu_custom_call.1} parent=31 // pred_region
          %vm261 = vcmask 7168
          %262 = vst.msk [vmem:[#allocation2] sm:$0xff] %vm261, 0.0
          %263 = vst.msk [vmem:[#allocation2 + $0x8] sm:$0xff] %vm261, 0.0
          %264 = vst.msk [vmem:[#allocation2 + $0x10] sm:$0xff] %vm261, 0.0
          %265 = vst.msk [vmem:[#allocation2 + $0x18] sm:$0xff] %vm261, 0.0
          %266 = vst.msk [vmem:[#allocation2 + $0x20] sm:$0xff] %vm261, 0.0
          %267 = vst.msk [vmem:[#allocation2 + $0x28] sm:$0xff] %vm261, 0.0
          %268 = vst.msk [vmem:[#allocation2 + $0x30] sm:$0xff] %vm261, 0.0
          %269 = vst.msk [vmem:[#allocation2 + $0x38] sm:$0xff] %vm261, 0.0
          %270 = vst.msk [vmem:[#allocation2 + $0x40] sm:$0xff] %vm261, 0.0
          %271 = vst.msk [vmem:[#allocation2 + $0x48] sm:$0xff] %vm261, 0.0
          %272 = vst.msk [vmem:[#allocation2 + $0x50] sm:$0xff] %vm261, 0.0
          %273 = vst.msk [vmem:[#allocation2 + $0x58] sm:$0xff] %vm261, 0.0
          %274 = vst.msk [vmem:[#allocation2 + $0x60] sm:$0xff] %vm261, 0.0
          %275 = vst.msk [vmem:[#allocation2 + $0x68] sm:$0xff] %vm261, 0.0
          %276 = vst.msk [vmem:[#allocation2 + $0x70] sm:$0xff] %vm261, 0.0
          %277 = vst.msk [vmem:[#allocation2 + $0x78] sm:$0xff] %vm261, 0.0
          %278 = vst.msk [vmem:[#allocation2 + $0x80] sm:$0xff] %vm261, 0.0
          %279 = vst.msk [vmem:[#allocation2 + $0x88] sm:$0xff] %vm261, 0.0
          %280 = vst.msk [vmem:[#allocation2 + $0x90] sm:$0xff] %vm261, 0.0
          %281 = vst.msk [vmem:[#allocation2 + $0x98] sm:$0xff] %vm261, 0.0
          %282 = vst.msk [vmem:[#allocation2 + $0xa0] sm:$0xff] %vm261, 0.0
          %283 = vst.msk [vmem:[#allocation2 + $0xa8] sm:$0xff] %vm261, 0.0
          %284 = vst.msk [vmem:[#allocation2 + $0xb0] sm:$0xff] %vm261, 0.0
          %285 = vst.msk [vmem:[#allocation2 + $0xb8] sm:$0xff] %vm261, 0.0
          %286 = vst.msk [vmem:[#allocation2 + $0xc0] sm:$0xff] %vm261, 0.0
          %287 = vst.msk [vmem:[#allocation2 + $0xc8] sm:$0xff] %vm261, 0.0
          %288 = vst.msk [vmem:[#allocation2 + $0xd0] sm:$0xff] %vm261, 0.0
          %289 = vst.msk [vmem:[#allocation2 + $0xd8] sm:$0xff] %vm261, 0.0
          %290 = vst.msk [vmem:[#allocation2 + $0xe0] sm:$0xff] %vm261, 0.0
          %291 = vst.msk [vmem:[#allocation2 + $0xe8] sm:$0xff] %vm261, 0.0
          %292 = vst.msk [vmem:[#allocation2 + $0xf0] sm:$0xff] %vm261, 0.0
          %293 = vst.msk [vmem:[#allocation2 + $0xf8] sm:$0xff] %vm261, 0.0
          %294 = vst.msk [vmem:[#allocation3] sm:$0xff] %vm261, 0.0
          %295 = vst.msk [vmem:[#allocation3 + $0x8] sm:$0xff] %vm261, 0.0
          %296 = vst.msk [vmem:[#allocation3 + $0x10] sm:$0xff] %vm261, 0.0
          %297 = vst.msk [vmem:[#allocation3 + $0x18] sm:$0xff] %vm261, 0.0
          %298 = vst.msk [vmem:[#allocation3 + $0x20] sm:$0xff] %vm261, 0.0
          %299 = vst.msk [vmem:[#allocation3 + $0x28] sm:$0xff] %vm261, 0.0
          %300 = vst.msk [vmem:[#allocation3 + $0x30] sm:$0xff] %vm261, 0.0
          %301 = vst.msk [vmem:[#allocation3 + $0x38] sm:$0xff] %vm261, 0.0
          %302 = vst.msk [vmem:[#allocation3 + $0x40] sm:$0xff] %vm261, 0.0
          %303 = vst.msk [vmem:[#allocation3 + $0x48] sm:$0xff] %vm261, 0.0
          %304 = vst.msk [vmem:[#allocation3 + $0x50] sm:$0xff] %vm261, 0.0
          %305 = vst.msk [vmem:[#allocation3 + $0x58] sm:$0xff] %vm261, 0.0
          %306 = vst.msk [vmem:[#allocation3 + $0x60] sm:$0xff] %vm261, 0.0
          %307 = vst.msk [vmem:[#allocation3 + $0x68] sm:$0xff] %vm261, 0.0
          %308 = vst.msk [vmem:[#allocation3 + $0x70] sm:$0xff] %vm261, 0.0
          %309 = vst.msk [vmem:[#allocation3 + $0x78] sm:$0xff] %vm261, 0.0
          %310 = vst.msk [vmem:[#allocation3 + $0x80] sm:$0xff] %vm261, 0.0
          %311 = vst.msk [vmem:[#allocation3 + $0x88] sm:$0xff] %vm261, 0.0
          %312 = vst.msk [vmem:[#allocation3 + $0x90] sm:$0xff] %vm261, 0.0
          %313 = vst.msk [vmem:[#allocation3 + $0x98] sm:$0xff] %vm261, 0.0
          %314 = vst.msk [vmem:[#allocation3 + $0xa0] sm:$0xff] %vm261, 0.0
          %315 = vst.msk [vmem:[#allocation3 + $0xa8] sm:$0xff] %vm261, 0.0
          %316 = vst.msk [vmem:[#allocation3 + $0xb0] sm:$0xff] %vm261, 0.0
          %317 = vst.msk [vmem:[#allocation3 + $0xb8] sm:$0xff] %vm261, 0.0
          %318 = vst.msk [vmem:[#allocation3 + $0xc0] sm:$0xff] %vm261, 0.0
          %319 = vst.msk [vmem:[#allocation3 + $0xc8] sm:$0xff] %vm261, 0.0
          %320 = vst.msk [vmem:[#allocation3 + $0xd0] sm:$0xff] %vm261, 0.0
          %321 = vst.msk [vmem:[#allocation3 + $0xd8] sm:$0xff] %vm261, 0.0
          %322 = vst.msk [vmem:[#allocation3 + $0xe0] sm:$0xff] %vm261, 0.0
          %323 = vst.msk [vmem:[#allocation3 + $0xe8] sm:$0xff] %vm261, 0.0
          %324 = vst.msk [vmem:[#allocation3 + $0xf0] sm:$0xff] %vm261, 0.0
          %325 = vst.msk [vmem:[#allocation3 + $0xf8] sm:$0xff] %vm261, 0.0
        $region48: #{tpu_custom_call.1} parent=31 // pred_fallthru
          _
        %v326 = vld [vmem:[%s208] sm:$0xff]
        %v327 = vld [vmem:[%s208 + $0x8] sm:$0xff]
        %v328 = vld [vmem:[%s208 + $0x10] sm:$0xff]
        %v329 = vld [vmem:[%s208 + $0x18] sm:$0xff]
        %v330 = vld [vmem:[%s208 + $0x20] sm:$0xff]
        %v331 = vld [vmem:[%s208 + $0x28] sm:$0xff]
        %v332 = vld [vmem:[%s208 + $0x30] sm:$0xff]
        %v333 = vld [vmem:[%s208 + $0x38] sm:$0xff]
        %v334 = vld [vmem:[%s208 + $0x40] sm:$0xff]
        %v335 = vld [vmem:[%s208 + $0x48] sm:$0xff]
        %v336 = vld [vmem:[%s208 + $0x50] sm:$0xff]
        %v337 = vld [vmem:[%s208 + $0x58] sm:$0xff]
        %v338 = vld [vmem:[%s208 + $0x60] sm:$0xff]
        %v339 = vld [vmem:[%s208 + $0x68] sm:$0xff]
        %v340 = vld [vmem:[%s208 + $0x70] sm:$0xff]
        %v341 = vld [vmem:[%s208 + $0x78] sm:$0xff]
        %v342 = vld [vmem:[%s208 + $0x80] sm:$0xff]
        %v343 = vld [vmem:[%s208 + $0x88] sm:$0xff]
        %v344 = vld [vmem:[%s208 + $0x90] sm:$0xff]
        %v345 = vld [vmem:[%s208 + $0x98] sm:$0xff]
        %v346 = vld [vmem:[%s208 + $0xa0] sm:$0xff]
        %v347 = vld [vmem:[%s208 + $0xa8] sm:$0xff]
        %v348 = vld [vmem:[%s208 + $0xb0] sm:$0xff]
        %v349 = vld [vmem:[%s208 + $0xb8] sm:$0xff]
        %v350 = vld [vmem:[%s208 + $0xc0] sm:$0xff]
        %v351 = vld [vmem:[%s208 + $0xc8] sm:$0xff]
        %v352 = vld [vmem:[%s208 + $0xd0] sm:$0xff]
        %v353 = vld [vmem:[%s208 + $0xd8] sm:$0xff]
        %v354 = vld [vmem:[%s208 + $0xe0] sm:$0xff]
        %v355 = vld [vmem:[%s208 + $0xe8] sm:$0xff]
        %v356 = vld [vmem:[%s208 + $0xf0] sm:$0xff]
        %v357 = vld [vmem:[%s208 + $0xf8] sm:$0xff]
        %v358 = vld [vmem:[%s217] sm:$0xff]
        %v359 = vld [vmem:[%s217 + $0x8] sm:$0xff]
        %v360 = vld [vmem:[%s217 + $0x10] sm:$0xff]
        %v361 = vld [vmem:[%s217 + $0x18] sm:$0xff]
        %v362 = vld [vmem:[%s217 + $0x20] sm:$0xff]
        %v363 = vld [vmem:[%s217 + $0x28] sm:$0xff]
        %v364 = vld [vmem:[%s217 + $0x30] sm:$0xff]
        %v365 = vld [vmem:[%s217 + $0x38] sm:$0xff]
        %v366 = vld [vmem:[%s217 + $0x40] sm:$0xff]
        %v367 = vld [vmem:[%s217 + $0x48] sm:$0xff]
        %v368 = vld [vmem:[%s217 + $0x50] sm:$0xff]
        %v369 = vld [vmem:[%s217 + $0x58] sm:$0xff]
        %v370 = vld [vmem:[%s217 + $0x60] sm:$0xff]
        %v371 = vld [vmem:[%s217 + $0x68] sm:$0xff]
        %v372 = vld [vmem:[%s217 + $0x70] sm:$0xff]
        %v373 = vld [vmem:[%s217 + $0x78] sm:$0xff]
        %v374 = vld [vmem:[%s217 + $0x80] sm:$0xff]
        %v375 = vld [vmem:[%s217 + $0x88] sm:$0xff]
        %v376 = vld [vmem:[%s217 + $0x90] sm:$0xff]
        %v377 = vld [vmem:[%s217 + $0x98] sm:$0xff]
        %v378 = vld [vmem:[%s217 + $0xa0] sm:$0xff]
        %v379 = vld [vmem:[%s217 + $0xa8] sm:$0xff]
        %v380 = vld [vmem:[%s217 + $0xb0] sm:$0xff]
        %v381 = vld [vmem:[%s217 + $0xb8] sm:$0xff]
        %v382 = vld [vmem:[%s217 + $0xc0] sm:$0xff]
        %v383 = vld [vmem:[%s217 + $0xc8] sm:$0xff]
        %v384 = vld [vmem:[%s217 + $0xd0] sm:$0xff]
        %v385 = vld [vmem:[%s217 + $0xd8] sm:$0xff]
        %v386 = vld [vmem:[%s217 + $0xe0] sm:$0xff]
        %v387 = vld [vmem:[%s217 + $0xe8] sm:$0xff]
        %v388 = vld [vmem:[%s217 + $0xf0] sm:$0xff]
        %v389 = vld [vmem:[%s217 + $0xf8] sm:$0xff]
        %v390 = vld [vmem:[%s226] sm:$0xff]
        %v391 = vld [vmem:[%s226 + $0x8] sm:$0xff]
        %v392 = vld [vmem:[%s226 + $0x10] sm:$0xff]
        %v393 = vld [vmem:[%s226 + $0x18] sm:$0xff]
        %v394 = vld [vmem:[%s226 + $0x20] sm:$0xff]
        %v395 = vld [vmem:[%s226 + $0x28] sm:$0xff]
        %v396 = vld [vmem:[%s226 + $0x30] sm:$0xff]
        %v397 = vld [vmem:[%s226 + $0x38] sm:$0xff]
        %v398 = vld [vmem:[%s226 + $0x40] sm:$0xff]
        %v399 = vld [vmem:[%s226 + $0x48] sm:$0xff]
        %v400 = vld [vmem:[%s226 + $0x50] sm:$0xff]
        %v401 = vld [vmem:[%s226 + $0x58] sm:$0xff]
        %v402 = vld [vmem:[%s226 + $0x60] sm:$0xff]
        %v403 = vld [vmem:[%s226 + $0x68] sm:$0xff]
        %v404 = vld [vmem:[%s226 + $0x70] sm:$0xff]
        %v405 = vld [vmem:[%s226 + $0x78] sm:$0xff]
        %v406 = vld [vmem:[%s226 + $0x80] sm:$0xff]
        %v407 = vld [vmem:[%s226 + $0x88] sm:$0xff]
        %v408 = vld [vmem:[%s226 + $0x90] sm:$0xff]
        %v409 = vld [vmem:[%s226 + $0x98] sm:$0xff]
        %v410 = vld [vmem:[%s226 + $0xa0] sm:$0xff]
        %v411 = vld [vmem:[%s226 + $0xa8] sm:$0xff]
        %v412 = vld [vmem:[%s226 + $0xb0] sm:$0xff]
        %v413 = vld [vmem:[%s226 + $0xb8] sm:$0xff]
        %v414 = vld [vmem:[%s226 + $0xc0] sm:$0xff]
        %v415 = vld [vmem:[%s226 + $0xc8] sm:$0xff]
        %v416 = vld [vmem:[%s226 + $0xd0] sm:$0xff]
        %v417 = vld [vmem:[%s226 + $0xd8] sm:$0xff]
        %v418 = vld [vmem:[%s226 + $0xe0] sm:$0xff]
        %v419 = vld [vmem:[%s226 + $0xe8] sm:$0xff]
        %v420 = vld [vmem:[%s226 + $0xf0] sm:$0xff]
        %v421 = vld [vmem:[%s226 + $0xf8] sm:$0xff]
        %v422 = vsub.f32 %v358, %v390
        %v423 = vsub.f32 %v359, %v391
        %v424 = vsub.f32 %v360, %v392
        %v425 = vsub.f32 %v361, %v393
        %v426 = vsub.f32 %v362, %v394
        %v427 = vsub.f32 %v363, %v395
        %v428 = vsub.f32 %v364, %v396
        %v429 = vsub.f32 %v365, %v397
        %v430 = vsub.f32 %v366, %v398
        %v431 = vsub.f32 %v367, %v399
        %v432 = vsub.f32 %v368, %v400
        %v433 = vsub.f32 %v369, %v401
        %v434 = vsub.f32 %v370, %v402
        %v435 = vsub.f32 %v371, %v403
        %v436 = vsub.f32 %v372, %v404
        %v437 = vsub.f32 %v373, %v405
        %v438 = vsub.f32 %v374, %v406
        %v439 = vsub.f32 %v375, %v407
        %v440 = vsub.f32 %v376, %v408
        %v441 = vsub.f32 %v377, %v409
        %v442 = vsub.f32 %v378, %v410
        %v443 = vsub.f32 %v379, %v411
        %v444 = vsub.f32 %v380, %v412
        %v445 = vsub.f32 %v381, %v413
        %v446 = vsub.f32 %v382, %v414
        %v447 = vsub.f32 %v383, %v415
        %v448 = vsub.f32 %v384, %v416
        %v449 = vsub.f32 %v385, %v417
        %v450 = vsub.f32 %v386, %v418
        %v451 = vsub.f32 %v387, %v419
        %v452 = vsub.f32 %v388, %v420
        %v453 = vsub.f32 %v389, %v421
        %v454 = vmul.f32 %v326, %v422
        %v455 = vmul.f32 %v327, %v423
        %v456 = vmul.f32 %v328, %v424
        %v457 = vmul.f32 %v329, %v425
        %v458 = vmul.f32 %v330, %v426
        %v459 = vmul.f32 %v331, %v427
        %v460 = vmul.f32 %v332, %v428
        %v461 = vmul.f32 %v333, %v429
        %v462 = vmul.f32 %v334, %v430
        %v463 = vmul.f32 %v335, %v431
        %v464 = vmul.f32 %v336, %v432
        %v465 = vmul.f32 %v337, %v433
        %v466 = vmul.f32 %v338, %v434
        %v467 = vmul.f32 %v339, %v435
        %v468 = vmul.f32 %v340, %v436
        %v469 = vmul.f32 %v341, %v437
        %v470 = vmul.f32 %v342, %v438
        %v471 = vmul.f32 %v343, %v439
        %v472 = vmul.f32 %v344, %v440
        %v473 = vmul.f32 %v345, %v441
        %v474 = vmul.f32 %v346, %v442
        %v475 = vmul.f32 %v347, %v443
        %v476 = vmul.f32 %v348, %v444
        %v477 = vmul.f32 %v349, %v445
        %v478 = vmul.f32 %v350, %v446
        %v479 = vmul.f32 %v351, %v447
        %v480 = vmul.f32 %v352, %v448
        %v481 = vmul.f32 %v353, %v449
        %v482 = vmul.f32 %v354, %v450
        %v483 = vmul.f32 %v355, %v451
        %v484 = vmul.f32 %v356, %v452
        %v485 = vmul.f32 %v357, %v453
        %486 = vadd.xlane.f32.xlu0 %v454
        %v487 = vpop.xlane.xlu0 %486
        %488 = vadd.xlane.f32.xlu0 %v455
        %v489 = vpop.xlane.xlu0 %488
        %490 = vadd.xlane.f32.xlu0 %v456
        %v491 = vpop.xlane.xlu0 %490
        %492 = vadd.xlane.f32.xlu0 %v457
        %v493 = vpop.xlane.xlu0 %492
        %494 = vadd.xlane.f32.xlu0 %v458
        %v495 = vpop.xlane.xlu0 %494
        %496 = vadd.xlane.f32.xlu0 %v459
        %v497 = vpop.xlane.xlu0 %496
        %498 = vadd.xlane.f32.xlu0 %v460
        %v499 = vpop.xlane.xlu0 %498
        %500 = vadd.xlane.f32.xlu0 %v461
        %v501 = vpop.xlane.xlu0 %500
        %502 = vadd.xlane.f32.xlu0 %v462
        %v503 = vpop.xlane.xlu0 %502
        %504 = vadd.xlane.f32.xlu0 %v463
        %v505 = vpop.xlane.xlu0 %504
        %506 = vadd.xlane.f32.xlu0 %v464
        %v507 = vpop.xlane.xlu0 %506
        %508 = vadd.xlane.f32.xlu0 %v465
        %v509 = vpop.xlane.xlu0 %508
        %510 = vadd.xlane.f32.xlu0 %v466
        %v511 = vpop.xlane.xlu0 %510
        %512 = vadd.xlane.f32.xlu0 %v467
        %v513 = vpop.xlane.xlu0 %512
        %514 = vadd.xlane.f32.xlu0 %v468
        %v515 = vpop.xlane.xlu0 %514
        %516 = vadd.xlane.f32.xlu0 %v469
        %v517 = vpop.xlane.xlu0 %516
        %518 = vadd.xlane.f32.xlu0 %v470
        %v519 = vpop.xlane.xlu0 %518
        %520 = vadd.xlane.f32.xlu0 %v471
        %v521 = vpop.xlane.xlu0 %520
        %522 = vadd.xlane.f32.xlu0 %v472
        %v523 = vpop.xlane.xlu0 %522
        %524 = vadd.xlane.f32.xlu0 %v473
        %v525 = vpop.xlane.xlu0 %524
        %526 = vadd.xlane.f32.xlu0 %v474
        %v527 = vpop.xlane.xlu0 %526
        %528 = vadd.xlane.f32.xlu0 %v475
        %v529 = vpop.xlane.xlu0 %528
        %530 = vadd.xlane.f32.xlu0 %v476
        %v531 = vpop.xlane.xlu0 %530
        %532 = vadd.xlane.f32.xlu0 %v477
        %v533 = vpop.xlane.xlu0 %532
        %534 = vadd.xlane.f32.xlu0 %v478
        %v535 = vpop.xlane.xlu0 %534
        %536 = vadd.xlane.f32.xlu0 %v479
        %v537 = vpop.xlane.xlu0 %536
        %538 = vadd.xlane.f32.xlu0 %v480
        %v539 = vpop.xlane.xlu0 %538
        %540 = vadd.xlane.f32.xlu0 %v481
        %v541 = vpop.xlane.xlu0 %540
        %542 = vadd.xlane.f32.xlu0 %v482
        %v543 = vpop.xlane.xlu0 %542
        %544 = vadd.xlane.f32.xlu0 %v483
        %v545 = vpop.xlane.xlu0 %544
        %546 = vadd.xlane.f32.xlu0 %v484
        %v547 = vpop.xlane.xlu0 %546
        %548 = vadd.xlane.f32.xlu0 %v485
        %v549 = vpop.xlane.xlu0 %548
        %v550 = vsub.f32 0.0, %v487
        %v551 = vsub.f32 0.0, %v489
        %v552 = vsub.f32 0.0, %v491
        %v553 = vsub.f32 0.0, %v493
        %v554 = vsub.f32 0.0, %v495
        %v555 = vsub.f32 0.0, %v497
        %v556 = vsub.f32 0.0, %v499
        %v557 = vsub.f32 0.0, %v501
        %v558 = vsub.f32 0.0, %v503
        %v559 = vsub.f32 0.0, %v505
        %v560 = vsub.f32 0.0, %v507
        %v561 = vsub.f32 0.0, %v509
        %v562 = vsub.f32 0.0, %v511
        %v563 = vsub.f32 0.0, %v513
        %v564 = vsub.f32 0.0, %v515
        %v565 = vsub.f32 0.0, %v517
        %v566 = vsub.f32 0.0, %v519
        %v567 = vsub.f32 0.0, %v521
        %v568 = vsub.f32 0.0, %v523
        %v569 = vsub.f32 0.0, %v525
        %v570 = vsub.f32 0.0, %v527
        %v571 = vsub.f32 0.0, %v529
        %v572 = vsub.f32 0.0, %v531
        %v573 = vsub.f32 0.0, %v533
        %v574 = vsub.f32 0.0, %v535
        %v575 = vsub.f32 0.0, %v537
        %v576 = vsub.f32 0.0, %v539
        %v577 = vsub.f32 0.0, %v541
        %v578 = vsub.f32 0.0, %v543
        %v579 = vsub.f32 0.0, %v545
        %v580 = vsub.f32 0.0, %v547
        %v581 = vsub.f32 0.0, %v549
        %v582 = vmax.f32 %v550, 0.0
        %v583 = vmax.f32 %v551, 0.0
        %v584 = vmax.f32 %v552, 0.0
        %v585 = vmax.f32 %v553, 0.0
        %v586 = vmax.f32 %v554, 0.0
        %v587 = vmax.f32 %v555, 0.0
        %v588 = vmax.f32 %v556, 0.0
        %v589 = vmax.f32 %v557, 0.0
        %v590 = vmax.f32 %v558, 0.0
        %v591 = vmax.f32 %v559, 0.0
        %v592 = vmax.f32 %v560, 0.0
        %v593 = vmax.f32 %v561, 0.0
        %v594 = vmax.f32 %v562, 0.0
        %v595 = vmax.f32 %v563, 0.0
        %v596 = vmax.f32 %v564, 0.0
        %v597 = vmax.f32 %v565, 0.0
        %v598 = vmax.f32 %v566, 0.0
        %v599 = vmax.f32 %v567, 0.0
        %v600 = vmax.f32 %v568, 0.0
        %v601 = vmax.f32 %v569, 0.0
        %v602 = vmax.f32 %v570, 0.0
        %v603 = vmax.f32 %v571, 0.0
        %v604 = vmax.f32 %v572, 0.0
        %v605 = vmax.f32 %v573, 0.0
        %v606 = vmax.f32 %v574, 0.0
        %v607 = vmax.f32 %v575, 0.0
        %v608 = vmax.f32 %v576, 0.0
        %v609 = vmax.f32 %v577, 0.0
        %v610 = vmax.f32 %v578, 0.0
        %v611 = vmax.f32 %v579, 0.0
        %v612 = vmax.f32 %v580, 0.0
        %v613 = vmax.f32 %v581, 0.0
        %v614 = vand.u32 2147483647, %v487
        %v615 = vand.u32 2147483647, %v489
        %v616 = vand.u32 2147483647, %v491
        %v617 = vand.u32 2147483647, %v493
        %v618 = vand.u32 2147483647, %v495
        %v619 = vand.u32 2147483647, %v497
        %v620 = vand.u32 2147483647, %v499
        %v621 = vand.u32 2147483647, %v501
        %v622 = vand.u32 2147483647, %v503
        %v623 = vand.u32 2147483647, %v505
        %v624 = vand.u32 2147483647, %v507
        %v625 = vand.u32 2147483647, %v509
        %v626 = vand.u32 2147483647, %v511
        %v627 = vand.u32 2147483647, %v513
        %v628 = vand.u32 2147483647, %v515
        %v629 = vand.u32 2147483647, %v517
        %v630 = vand.u32 2147483647, %v519
        %v631 = vand.u32 2147483647, %v521
        %v632 = vand.u32 2147483647, %v523
        %v633 = vand.u32 2147483647, %v525
        %v634 = vand.u32 2147483647, %v527
        %v635 = vand.u32 2147483647, %v529
        %v636 = vand.u32 2147483647, %v531
        %v637 = vand.u32 2147483647, %v533
        %v638 = vand.u32 2147483647, %v535
        %v639 = vand.u32 2147483647, %v537
        %v640 = vand.u32 2147483647, %v539
        %v641 = vand.u32 2147483647, %v541
        %v642 = vand.u32 2147483647, %v543
        %v643 = vand.u32 2147483647, %v545
        %v644 = vand.u32 2147483647, %v547
        %v645 = vand.u32 2147483647, %v549
        %v646 = vsub.f32 0.0, %v614
        %v647 = vsub.f32 0.0, %v615
        %v648 = vsub.f32 0.0, %v616
        %v649 = vsub.f32 0.0, %v617
        %v650 = vsub.f32 0.0, %v618
        %v651 = vsub.f32 0.0, %v619
        %v652 = vsub.f32 0.0, %v620
        %v653 = vsub.f32 0.0, %v621
        %v654 = vsub.f32 0.0, %v622
        %v655 = vsub.f32 0.0, %v623
        %v656 = vsub.f32 0.0, %v624
        %v657 = vsub.f32 0.0, %v625
        %v658 = vsub.f32 0.0, %v626
        %v659 = vsub.f32 0.0, %v627
        %v660 = vsub.f32 0.0, %v628
        %v661 = vsub.f32 0.0, %v629
        %v662 = vsub.f32 0.0, %v630
        %v663 = vsub.f32 0.0, %v631
        %v664 = vsub.f32 0.0, %v632
        %v665 = vsub.f32 0.0, %v633
        %v666 = vsub.f32 0.0, %v634
        %v667 = vsub.f32 0.0, %v635
        %v668 = vsub.f32 0.0, %v636
        %v669 = vsub.f32 0.0, %v637
        %v670 = vsub.f32 0.0, %v638
        %v671 = vsub.f32 0.0, %v639
        %v672 = vsub.f32 0.0, %v640
        %v673 = vsub.f32 0.0, %v641
        %v674 = vsub.f32 0.0, %v642
        %v675 = vsub.f32 0.0, %v643
        %v676 = vsub.f32 0.0, %v644
        %v677 = vsub.f32 0.0, %v645
        %v678 = vmul.f32 %v646, 1.442695
        %v679 = vpow.pop %v678
        %v680 = vmul.f32 %v647, 1.442695
        %v681 = vpow.pop %v680
        %v682 = vmul.f32 %v648, 1.442695
        %v683 = vpow.pop %v682
        %v684 = vmul.f32 %v649, 1.442695
        %v685 = vpow.pop %v684
        %v686 = vmul.f32 %v650, 1.442695
        %v687 = vpow.pop %v686
        %v688 = vmul.f32 %v651, 1.442695
        %v689 = vpow.pop %v688
        %v690 = vmul.f32 %v652, 1.442695
        %v691 = vpow.pop %v690
        %v692 = vmul.f32 %v653, 1.442695
        %v693 = vpow.pop %v692
        %v694 = vmul.f32 %v654, 1.442695
        %v695 = vpow.pop %v694
        %v696 = vmul.f32 %v655, 1.442695
        %v697 = vpow.pop %v696
        %v698 = vmul.f32 %v656, 1.442695
        %v699 = vpow.pop %v698
        %v700 = vmul.f32 %v657, 1.442695
        %v701 = vpow.pop %v700
        %v702 = vmul.f32 %v658, 1.442695
        %v703 = vpow.pop %v702
        %v704 = vmul.f32 %v659, 1.442695
        %v705 = vpow.pop %v704
        %v706 = vmul.f32 %v660, 1.442695
        %v707 = vpow.pop %v706
        %v708 = vmul.f32 %v661, 1.442695
        %v709 = vpow.pop %v708
        %v710 = vmul.f32 %v662, 1.442695
        %v711 = vpow.pop %v710
        %v712 = vmul.f32 %v663, 1.442695
        %v713 = vpow.pop %v712
        %v714 = vmul.f32 %v664, 1.442695
        %v715 = vpow.pop %v714
        %v716 = vmul.f32 %v665, 1.442695
        %v717 = vpow.pop %v716
        %v718 = vmul.f32 %v666, 1.442695
        %v719 = vpow.pop %v718
        %v720 = vmul.f32 %v667, 1.442695
        %v721 = vpow.pop %v720
        %v722 = vmul.f32 %v668, 1.442695
        %v723 = vpow.pop %v722
        %v724 = vmul.f32 %v669, 1.442695
        %v725 = vpow.pop %v724
        %v726 = vmul.f32 %v670, 1.442695
        %v727 = vpow.pop %v726
        %v728 = vmul.f32 %v671, 1.442695
        %v729 = vpow.pop %v728
        %v730 = vmul.f32 %v672, 1.442695
        %v731 = vpow.pop %v730
        %v732 = vmul.f32 %v673, 1.442695
        %v733 = vpow.pop %v732
        %v734 = vmul.f32 %v674, 1.442695
        %v735 = vpow.pop %v734
        %v736 = vmul.f32 %v675, 1.442695
        %v737 = vpow.pop %v736
        %v738 = vmul.f32 %v676, 1.442695
        %v739 = vpow.pop %v738
        %v740 = vmul.f32 %v677, 1.442695
        %v741 = vpow.pop %v740
        %v742 = vadd.f32 %v679, 1.0
        %v743 = vlog2.pop %v742
        %v744 = vmul.f32 %v743, 0.6931472
        %v745 = vmul.f32 -0.5, %v679
        %v746 = vadd.f32 %v745, 1.0
        %v747 = vmul.f32 %v746, %v679
        %v748 = vand.u32 2147483647, %v679
        %vm749 = vcmp.lt.f32.partialorder %v748, 0.0004427343
        %v750 = vsel %vm749, %v747, %v744
        %v751 = vadd.f32 %v681, 1.0
        %v752 = vlog2.pop %v751
        %v753 = vmul.f32 %v752, 0.6931472
        %v754 = vmul.f32 -0.5, %v681
        %v755 = vadd.f32 %v754, 1.0
        %v756 = vmul.f32 %v755, %v681
        %v757 = vand.u32 2147483647, %v681
        %vm758 = vcmp.lt.f32.partialorder %v757, 0.0004427343
        %v759 = vsel %vm758, %v756, %v753
        %v760 = vadd.f32 %v683, 1.0
        %v761 = vlog2.pop %v760
        %v762 = vmul.f32 %v761, 0.6931472
        %v763 = vmul.f32 -0.5, %v683
        %v764 = vadd.f32 %v763, 1.0
        %v765 = vmul.f32 %v764, %v683
        %v766 = vand.u32 2147483647, %v683
        %vm767 = vcmp.lt.f32.partialorder %v766, 0.0004427343
        %v768 = vsel %vm767, %v765, %v762
        %v769 = vadd.f32 %v685, 1.0
        %v770 = vlog2.pop %v769
        %v771 = vmul.f32 %v770, 0.6931472
        %v772 = vmul.f32 -0.5, %v685
        %v773 = vadd.f32 %v772, 1.0
        %v774 = vmul.f32 %v773, %v685
        %v775 = vand.u32 2147483647, %v685
        %vm776 = vcmp.lt.f32.partialorder %v775, 0.0004427343
        %v777 = vsel %vm776, %v774, %v771
        %v778 = vadd.f32 %v687, 1.0
        %v779 = vlog2.pop %v778
        %v780 = vmul.f32 %v779, 0.6931472
        %v781 = vmul.f32 -0.5, %v687
        %v782 = vadd.f32 %v781, 1.0
        %v783 = vmul.f32 %v782, %v687
        %v784 = vand.u32 2147483647, %v687
        %vm785 = vcmp.lt.f32.partialorder %v784, 0.0004427343
        %v786 = vsel %vm785, %v783, %v780
        %v787 = vadd.f32 %v689, 1.0
        %v788 = vlog2.pop %v787
        %v789 = vmul.f32 %v788, 0.6931472
        %v790 = vmul.f32 -0.5, %v689
        %v791 = vadd.f32 %v790, 1.0
        %v792 = vmul.f32 %v791, %v689
        %v793 = vand.u32 2147483647, %v689
        %vm794 = vcmp.lt.f32.partialorder %v793, 0.0004427343
        %v795 = vsel %vm794, %v792, %v789
        %v796 = vadd.f32 %v691, 1.0
        %v797 = vlog2.pop %v796
        %v798 = vmul.f32 %v797, 0.6931472
        %v799 = vmul.f32 -0.5, %v691
        %v800 = vadd.f32 %v799, 1.0
        %v801 = vmul.f32 %v800, %v691
        %v802 = vand.u32 2147483647, %v691
        %vm803 = vcmp.lt.f32.partialorder %v802, 0.0004427343
        %v804 = vsel %vm803, %v801, %v798
        %v805 = vadd.f32 %v693, 1.0
        %v806 = vlog2.pop %v805
        %v807 = vmul.f32 %v806, 0.6931472
        %v808 = vmul.f32 -0.5, %v693
        %v809 = vadd.f32 %v808, 1.0
        %v810 = vmul.f32 %v809, %v693
        %v811 = vand.u32 2147483647, %v693
        %vm812 = vcmp.lt.f32.partialorder %v811, 0.0004427343
        %v813 = vsel %vm812, %v810, %v807
        %v814 = vadd.f32 %v695, 1.0
        %v815 = vlog2.pop %v814
        %v816 = vmul.f32 %v815, 0.6931472
        %v817 = vmul.f32 -0.5, %v695
        %v818 = vadd.f32 %v817, 1.0
        %v819 = vmul.f32 %v818, %v695
        %v820 = vand.u32 2147483647, %v695
        %vm821 = vcmp.lt.f32.partialorder %v820, 0.0004427343
        %v822 = vsel %vm821, %v819, %v816
        %v823 = vadd.f32 %v697, 1.0
        %v824 = vlog2.pop %v823
        %v825 = vmul.f32 %v824, 0.6931472
        %v826 = vmul.f32 -0.5, %v697
        %v827 = vadd.f32 %v826, 1.0
        %v828 = vmul.f32 %v827, %v697
        %v829 = vand.u32 2147483647, %v697
        %vm830 = vcmp.lt.f32.partialorder %v829, 0.0004427343
        %v831 = vsel %vm830, %v828, %v825
        %v832 = vadd.f32 %v699, 1.0
        %v833 = vlog2.pop %v832
        %v834 = vmul.f32 %v833, 0.6931472
        %v835 = vmul.f32 -0.5, %v699
        %v836 = vadd.f32 %v835, 1.0
        %v837 = vmul.f32 %v836, %v699
        %v838 = vand.u32 2147483647, %v699
        %vm839 = vcmp.lt.f32.partialorder %v838, 0.0004427343
        %v840 = vsel %vm839, %v837, %v834
        %v841 = vadd.f32 %v701, 1.0
        %v842 = vlog2.pop %v841
        %v843 = vmul.f32 %v842, 0.6931472
        %v844 = vmul.f32 -0.5, %v701
        %v845 = vadd.f32 %v844, 1.0
        %v846 = vmul.f32 %v845, %v701
        %v847 = vand.u32 2147483647, %v701
        %vm848 = vcmp.lt.f32.partialorder %v847, 0.0004427343
        %v849 = vsel %vm848, %v846, %v843
        %v850 = vadd.f32 %v703, 1.0
        %v851 = vlog2.pop %v850
        %v852 = vmul.f32 %v851, 0.6931472
        %v853 = vmul.f32 -0.5, %v703
        %v854 = vadd.f32 %v853, 1.0
        %v855 = vmul.f32 %v854, %v703
        %v856 = vand.u32 2147483647, %v703
        %vm857 = vcmp.lt.f32.partialorder %v856, 0.0004427343
        %v858 = vsel %vm857, %v855, %v852
        %v859 = vadd.f32 %v705, 1.0
        %v860 = vlog2.pop %v859
        %v861 = vmul.f32 %v860, 0.6931472
        %v862 = vmul.f32 -0.5, %v705
        %v863 = vadd.f32 %v862, 1.0
        %v864 = vmul.f32 %v863, %v705
        %v865 = vand.u32 2147483647, %v705
        %vm866 = vcmp.lt.f32.partialorder %v865, 0.0004427343
        %v867 = vsel %vm866, %v864, %v861
        %v868 = vadd.f32 %v707, 1.0
        %v869 = vlog2.pop %v868
        %v870 = vmul.f32 %v869, 0.6931472
        %v871 = vmul.f32 -0.5, %v707
        %v872 = vadd.f32 %v871, 1.0
        %v873 = vmul.f32 %v872, %v707
        %v874 = vand.u32 2147483647, %v707
        %vm875 = vcmp.lt.f32.partialorder %v874, 0.0004427343
        %v876 = vsel %vm875, %v873, %v870
        %v877 = vadd.f32 %v709, 1.0
        %v878 = vlog2.pop %v877
        %v879 = vmul.f32 %v878, 0.6931472
        %v880 = vmul.f32 -0.5, %v709
        %v881 = vadd.f32 %v880, 1.0
        %v882 = vmul.f32 %v881, %v709
        %v883 = vand.u32 2147483647, %v709
        %vm884 = vcmp.lt.f32.partialorder %v883, 0.0004427343
        %v885 = vsel %vm884, %v882, %v879
        %v886 = vadd.f32 %v711, 1.0
        %v887 = vlog2.pop %v886
        %v888 = vmul.f32 %v887, 0.6931472
        %v889 = vmul.f32 -0.5, %v711
        %v890 = vadd.f32 %v889, 1.0
        %v891 = vmul.f32 %v890, %v711
        %v892 = vand.u32 2147483647, %v711
        %vm893 = vcmp.lt.f32.partialorder %v892, 0.0004427343
        %v894 = vsel %vm893, %v891, %v888
        %v895 = vadd.f32 %v713, 1.0
        %v896 = vlog2.pop %v895
        %v897 = vmul.f32 %v896, 0.6931472
        %v898 = vmul.f32 -0.5, %v713
        %v899 = vadd.f32 %v898, 1.0
        %v900 = vmul.f32 %v899, %v713
        %v901 = vand.u32 2147483647, %v713
        %vm902 = vcmp.lt.f32.partialorder %v901, 0.0004427343
        %v903 = vsel %vm902, %v900, %v897
        %v904 = vadd.f32 %v715, 1.0
        %v905 = vlog2.pop %v904
        %v906 = vmul.f32 %v905, 0.6931472
        %v907 = vmul.f32 -0.5, %v715
        %v908 = vadd.f32 %v907, 1.0
        %v909 = vmul.f32 %v908, %v715
        %v910 = vand.u32 2147483647, %v715
        %vm911 = vcmp.lt.f32.partialorder %v910, 0.0004427343
        %v912 = vsel %vm911, %v909, %v906
        %v913 = vadd.f32 %v717, 1.0
        %v914 = vlog2.pop %v913
        %v915 = vmul.f32 %v914, 0.6931472
        %v916 = vmul.f32 -0.5, %v717
        %v917 = vadd.f32 %v916, 1.0
        %v918 = vmul.f32 %v917, %v717
        %v919 = vand.u32 2147483647, %v717
        %vm920 = vcmp.lt.f32.partialorder %v919, 0.0004427343
        %v921 = vsel %vm920, %v918, %v915
        %v922 = vadd.f32 %v719, 1.0
        %v923 = vlog2.pop %v922
        %v924 = vmul.f32 %v923, 0.6931472
        %v925 = vmul.f32 -0.5, %v719
        %v926 = vadd.f32 %v925, 1.0
        %v927 = vmul.f32 %v926, %v719
        %v928 = vand.u32 2147483647, %v719
        %vm929 = vcmp.lt.f32.partialorder %v928, 0.0004427343
        %v930 = vsel %vm929, %v927, %v924
        %v931 = vadd.f32 %v721, 1.0
        %v932 = vlog2.pop %v931
        %v933 = vmul.f32 %v932, 0.6931472
        %v934 = vmul.f32 -0.5, %v721
        %v935 = vadd.f32 %v934, 1.0
        %v936 = vmul.f32 %v935, %v721
        %v937 = vand.u32 2147483647, %v721
        %vm938 = vcmp.lt.f32.partialorder %v937, 0.0004427343
        %v939 = vsel %vm938, %v936, %v933
        %v940 = vadd.f32 %v723, 1.0
        %v941 = vlog2.pop %v940
        %v942 = vmul.f32 %v941, 0.6931472
        %v943 = vmul.f32 -0.5, %v723
        %v944 = vadd.f32 %v943, 1.0
        %v945 = vmul.f32 %v944, %v723
        %v946 = vand.u32 2147483647, %v723
        %vm947 = vcmp.lt.f32.partialorder %v946, 0.0004427343
        %v948 = vsel %vm947, %v945, %v942
        %v949 = vadd.f32 %v725, 1.0
        %v950 = vlog2.pop %v949
        %v951 = vmul.f32 %v950, 0.6931472
        %v952 = vmul.f32 -0.5, %v725
        %v953 = vadd.f32 %v952, 1.0
        %v954 = vmul.f32 %v953, %v725
        %v955 = vand.u32 2147483647, %v725
        %vm956 = vcmp.lt.f32.partialorder %v955, 0.0004427343
        %v957 = vsel %vm956, %v954, %v951
        %v958 = vadd.f32 %v727, 1.0
        %v959 = vlog2.pop %v958
        %v960 = vmul.f32 %v959, 0.6931472
        %v961 = vmul.f32 -0.5, %v727
        %v962 = vadd.f32 %v961, 1.0
        %v963 = vmul.f32 %v962, %v727
        %v964 = vand.u32 2147483647, %v727
        %vm965 = vcmp.lt.f32.partialorder %v964, 0.0004427343
        %v966 = vsel %vm965, %v963, %v960
        %v967 = vadd.f32 %v729, 1.0
        %v968 = vlog2.pop %v967
        %v969 = vmul.f32 %v968, 0.6931472
        %v970 = vmul.f32 -0.5, %v729
        %v971 = vadd.f32 %v970, 1.0
        %v972 = vmul.f32 %v971, %v729
        %v973 = vand.u32 2147483647, %v729
        %vm974 = vcmp.lt.f32.partialorder %v973, 0.0004427343
        %v975 = vsel %vm974, %v972, %v969
        %v976 = vadd.f32 %v731, 1.0
        %v977 = vlog2.pop %v976
        %v978 = vmul.f32 %v977, 0.6931472
        %v979 = vmul.f32 -0.5, %v731
        %v980 = vadd.f32 %v979, 1.0
        %v981 = vmul.f32 %v980, %v731
        %v982 = vand.u32 2147483647, %v731
        %vm983 = vcmp.lt.f32.partialorder %v982, 0.0004427343
        %v984 = vsel %vm983, %v981, %v978
        %v985 = vadd.f32 %v733, 1.0
        %v986 = vlog2.pop %v985
        %v987 = vmul.f32 %v986, 0.6931472
        %v988 = vmul.f32 -0.5, %v733
        %v989 = vadd.f32 %v988, 1.0
        %v990 = vmul.f32 %v989, %v733
        %v991 = vand.u32 2147483647, %v733
        %vm992 = vcmp.lt.f32.partialorder %v991, 0.0004427343
        %v993 = vsel %vm992, %v990, %v987
        %v994 = vadd.f32 %v735, 1.0
        %v995 = vlog2.pop %v994
        %v996 = vmul.f32 %v995, 0.6931472
        %v997 = vmul.f32 -0.5, %v735
        %v998 = vadd.f32 %v997, 1.0
        %v999 = vmul.f32 %v998, %v735
        %v1000 = vand.u32 2147483647, %v735
        %vm1001 = vcmp.lt.f32.partialorder %v1000, 0.0004427343
        %v1002 = vsel %vm1001, %v999, %v996
        %v1003 = vadd.f32 %v737, 1.0
        %v1004 = vlog2.pop %v1003
        %v1005 = vmul.f32 %v1004, 0.6931472
        %v1006 = vmul.f32 -0.5, %v737
        %v1007 = vadd.f32 %v1006, 1.0
        %v1008 = vmul.f32 %v1007, %v737
        %v1009 = vand.u32 2147483647, %v737
        %vm1010 = vcmp.lt.f32.partialorder %v1009, 0.0004427343
        %v1011 = vsel %vm1010, %v1008, %v1005
        %v1012 = vadd.f32 %v739, 1.0
        %v1013 = vlog2.pop %v1012
        %v1014 = vmul.f32 %v1013, 0.6931472
        %v1015 = vmul.f32 -0.5, %v739
        %v1016 = vadd.f32 %v1015, 1.0
        %v1017 = vmul.f32 %v1016, %v739
        %v1018 = vand.u32 2147483647, %v739
        %vm1019 = vcmp.lt.f32.partialorder %v1018, 0.0004427343
        %v1020 = vsel %vm1019, %v1017, %v1014
        %v1021 = vadd.f32 %v741, 1.0
        %v1022 = vlog2.pop %v1021
        %v1023 = vmul.f32 %v1022, 0.6931472
        %v1024 = vmul.f32 -0.5, %v741
        %v1025 = vadd.f32 %v1024, 1.0
        %v1026 = vmul.f32 %v1025, %v741
        %v1027 = vand.u32 2147483647, %v741
        %vm1028 = vcmp.lt.f32.partialorder %v1027, 0.0004427343
        %v1029 = vsel %vm1028, %v1026, %v1023
        %v1030 = vadd.f32 %v582, %v750
        %v1031 = vadd.f32 %v583, %v759
        %v1032 = vadd.f32 %v584, %v768
        %v1033 = vadd.f32 %v585, %v777
        %v1034 = vadd.f32 %v586, %v786
        %v1035 = vadd.f32 %v587, %v795
        %v1036 = vadd.f32 %v588, %v804
        %v1037 = vadd.f32 %v589, %v813
        %v1038 = vadd.f32 %v590, %v822
        %v1039 = vadd.f32 %v591, %v831
        %v1040 = vadd.f32 %v592, %v840
        %v1041 = vadd.f32 %v593, %v849
        %v1042 = vadd.f32 %v594, %v858
        %v1043 = vadd.f32 %v595, %v867
        %v1044 = vadd.f32 %v596, %v876
        %v1045 = vadd.f32 %v597, %v885
        %v1046 = vadd.f32 %v598, %v894
        %v1047 = vadd.f32 %v599, %v903
        %v1048 = vadd.f32 %v600, %v912
        %v1049 = vadd.f32 %v601, %v921
        %v1050 = vadd.f32 %v602, %v930
        %v1051 = vadd.f32 %v603, %v939
        %v1052 = vadd.f32 %v604, %v948
        %v1053 = vadd.f32 %v605, %v957
        %v1054 = vadd.f32 %v606, %v966
        %v1055 = vadd.f32 %v607, %v975
        %v1056 = vadd.f32 %v608, %v984
        %v1057 = vadd.f32 %v609, %v993
        %v1058 = vadd.f32 %v610, %v1002
        %v1059 = vadd.f32 %v611, %v1011
        %v1060 = vadd.f32 %v612, %v1020
        %v1061 = vadd.f32 %v613, %v1029
        %v1062 = vsub.f32 0.0, %v1030
        %v1063 = vsub.f32 0.0, %v1031
        %v1064 = vsub.f32 0.0, %v1032
        %v1065 = vsub.f32 0.0, %v1033
        %v1066 = vsub.f32 0.0, %v1034
        %v1067 = vsub.f32 0.0, %v1035
        %v1068 = vsub.f32 0.0, %v1036
        %v1069 = vsub.f32 0.0, %v1037
        %v1070 = vsub.f32 0.0, %v1038
        %v1071 = vsub.f32 0.0, %v1039
        %v1072 = vsub.f32 0.0, %v1040
        %v1073 = vsub.f32 0.0, %v1041
        %v1074 = vsub.f32 0.0, %v1042
        %v1075 = vsub.f32 0.0, %v1043
        %v1076 = vsub.f32 0.0, %v1044
        %v1077 = vsub.f32 0.0, %v1045
        %v1078 = vsub.f32 0.0, %v1046
        %v1079 = vsub.f32 0.0, %v1047
        %v1080 = vsub.f32 0.0, %v1048
        %v1081 = vsub.f32 0.0, %v1049
        %v1082 = vsub.f32 0.0, %v1050
        %v1083 = vsub.f32 0.0, %v1051
        %v1084 = vsub.f32 0.0, %v1052
        %v1085 = vsub.f32 0.0, %v1053
        %v1086 = vsub.f32 0.0, %v1054
        %v1087 = vsub.f32 0.0, %v1055
        %v1088 = vsub.f32 0.0, %v1056
        %v1089 = vsub.f32 0.0, %v1057
        %v1090 = vsub.f32 0.0, %v1058
        %v1091 = vsub.f32 0.0, %v1059
        %v1092 = vsub.f32 0.0, %v1060
        %v1093 = vsub.f32 0.0, %v1061
        %s1094 = smul.u32 %s21, 256
        %v1095 = vlaneseq
        %v1096 = vshrl.u32 %v1095, 7
        %v1097 = vadd.s32 %v1096, 8
        %v1098 = vadd.s32 %v1096, 16
        %v1099 = vadd.s32 %v1096, 24
        %v1100 = vadd.s32 %v1096, 32
        %v1101 = vadd.s32 %v1096, 40
        %v1102 = vadd.s32 %v1096, 48
        %v1103 = vadd.s32 %v1096, 56
        %v1104 = vadd.s32 %v1096, 64
        %v1105 = vadd.s32 %v1096, 72
        %v1106 = vadd.s32 %v1096, 80
        %v1107 = vadd.s32 %v1096, 88
        %v1108 = vadd.s32 %v1096, 96
        %v1109 = vadd.s32 %v1096, 104
        %v1110 = vadd.s32 %v1096, 112
        %v1111 = vadd.s32 %v1096, 120
        %v1112 = vadd.s32 %v1096, 128
        %v1113 = vadd.s32 %v1096, 136
        %v1114 = vadd.s32 %v1096, 144
        %v1115 = vadd.s32 %v1096, 152
        %v1116 = vadd.s32 %v1096, 160
        %v1117 = vadd.s32 %v1096, 168
        %v1118 = vadd.s32 %v1096, 176
        %v1119 = vadd.s32 %v1096, 184
        %v1120 = vadd.s32 %v1096, 192
        %v1121 = vadd.s32 %v1096, 200
        %v1122 = vadd.s32 %v1096, 208
        %v1123 = vadd.s32 %v1096, 216
        %v1124 = vadd.s32 %v1096, 224
        %v1125 = vadd.s32 %v1096, 232
        %v1126 = vadd.s32 %v1096, 240
        %v1127 = vadd.s32 %v1096, 248
        %v1128 = vstv %s1094
        %v1129 = vadd.s32 %v1128, %v1096
        %v1130 = vadd.s32 %v1128, %v1097
        %v1131 = vadd.s32 %v1128, %v1098
        %v1132 = vadd.s32 %v1128, %v1099
        %v1133 = vadd.s32 %v1128, %v1100
        %v1134 = vadd.s32 %v1128, %v1101
        %v1135 = vadd.s32 %v1128, %v1102
        %v1136 = vadd.s32 %v1128, %v1103
        %v1137 = vadd.s32 %v1128, %v1104
        %v1138 = vadd.s32 %v1128, %v1105
        %v1139 = vadd.s32 %v1128, %v1106
        %v1140 = vadd.s32 %v1128, %v1107
        %v1141 = vadd.s32 %v1128, %v1108
        %v1142 = vadd.s32 %v1128, %v1109
        %v1143 = vadd.s32 %v1128, %v1110
        %v1144 = vadd.s32 %v1128, %v1111
        %v1145 = vadd.s32 %v1128, %v1112
        %v1146 = vadd.s32 %v1128, %v1113
        %v1147 = vadd.s32 %v1128, %v1114
        %v1148 = vadd.s32 %v1128, %v1115
        %v1149 = vadd.s32 %v1128, %v1116
        %v1150 = vadd.s32 %v1128, %v1117
        %v1151 = vadd.s32 %v1128, %v1118
        %v1152 = vadd.s32 %v1128, %v1119
        %v1153 = vadd.s32 %v1128, %v1120
        %v1154 = vadd.s32 %v1128, %v1121
        %v1155 = vadd.s32 %v1128, %v1122
        %v1156 = vadd.s32 %v1128, %v1123
        %v1157 = vadd.s32 %v1128, %v1124
        %v1158 = vadd.s32 %v1128, %v1125
        %v1159 = vadd.s32 %v1128, %v1126
        %v1160 = vadd.s32 %v1128, %v1127
        %vm1161 = vcmp.lt.s32.totalorder %v1129, 300
        %vm1162 = vcmp.lt.s32.totalorder %v1130, 300
        %vm1163 = vcmp.lt.s32.totalorder %v1131, 300
        %vm1164 = vcmp.lt.s32.totalorder %v1132, 300
        %vm1165 = vcmp.lt.s32.totalorder %v1133, 300
        %vm1166 = vcmp.lt.s32.totalorder %v1134, 300
        %vm1167 = vcmp.lt.s32.totalorder %v1135, 300
        %vm1168 = vcmp.lt.s32.totalorder %v1136, 300
        %vm1169 = vcmp.lt.s32.totalorder %v1137, 300
        %vm1170 = vcmp.lt.s32.totalorder %v1138, 300
        %vm1171 = vcmp.lt.s32.totalorder %v1139, 300
        %vm1172 = vcmp.lt.s32.totalorder %v1140, 300
        %vm1173 = vcmp.lt.s32.totalorder %v1141, 300
        %vm1174 = vcmp.lt.s32.totalorder %v1142, 300
        %vm1175 = vcmp.lt.s32.totalorder %v1143, 300
        %vm1176 = vcmp.lt.s32.totalorder %v1144, 300
        %vm1177 = vcmp.lt.s32.totalorder %v1145, 300
        %vm1178 = vcmp.lt.s32.totalorder %v1146, 300
        %vm1179 = vcmp.lt.s32.totalorder %v1147, 300
        %vm1180 = vcmp.lt.s32.totalorder %v1148, 300
        %vm1181 = vcmp.lt.s32.totalorder %v1149, 300
        %vm1182 = vcmp.lt.s32.totalorder %v1150, 300
        %vm1183 = vcmp.lt.s32.totalorder %v1151, 300
        %vm1184 = vcmp.lt.s32.totalorder %v1152, 300
        %vm1185 = vcmp.lt.s32.totalorder %v1153, 300
        %vm1186 = vcmp.lt.s32.totalorder %v1154, 300
        %vm1187 = vcmp.lt.s32.totalorder %v1155, 300
        %vm1188 = vcmp.lt.s32.totalorder %v1156, 300
        %vm1189 = vcmp.lt.s32.totalorder %v1157, 300
        %vm1190 = vcmp.lt.s32.totalorder %v1158, 300
        %vm1191 = vcmp.lt.s32.totalorder %v1159, 300
        %vm1192 = vcmp.lt.s32.totalorder %v1160, 300
        %v1193 = vld [vmem:[#allocation2] sm:$0xff]
        %v1194 = vld [vmem:[#allocation2 + $0x8] sm:$0xff]
        %v1195 = vld [vmem:[#allocation2 + $0x10] sm:$0xff]
        %v1196 = vld [vmem:[#allocation2 + $0x18] sm:$0xff]
        %v1197 = vld [vmem:[#allocation2 + $0x20] sm:$0xff]
        %v1198 = vld [vmem:[#allocation2 + $0x28] sm:$0xff]
        %v1199 = vld [vmem:[#allocation2 + $0x30] sm:$0xff]
        %v1200 = vld [vmem:[#allocation2 + $0x38] sm:$0xff]
        %v1201 = vld [vmem:[#allocation2 + $0x40] sm:$0xff]
        %v1202 = vld [vmem:[#allocation2 + $0x48] sm:$0xff]
        %v1203 = vld [vmem:[#allocation2 + $0x50] sm:$0xff]
        %v1204 = vld [vmem:[#allocation2 + $0x58] sm:$0xff]
        %v1205 = vld [vmem:[#allocation2 + $0x60] sm:$0xff]
        %v1206 = vld [vmem:[#allocation2 + $0x68] sm:$0xff]
        %v1207 = vld [vmem:[#allocation2 + $0x70] sm:$0xff]
        %v1208 = vld [vmem:[#allocation2 + $0x78] sm:$0xff]
        %v1209 = vld [vmem:[#allocation2 + $0x80] sm:$0xff]
        %v1210 = vld [vmem:[#allocation2 + $0x88] sm:$0xff]
        %v1211 = vld [vmem:[#allocation2 + $0x90] sm:$0xff]
        %v1212 = vld [vmem:[#allocation2 + $0x98] sm:$0xff]
        %v1213 = vld [vmem:[#allocation2 + $0xa0] sm:$0xff]
        %v1214 = vld [vmem:[#allocation2 + $0xa8] sm:$0xff]
        %v1215 = vld [vmem:[#allocation2 + $0xb0] sm:$0xff]
        %v1216 = vld [vmem:[#allocation2 + $0xb8] sm:$0xff]
        %v1217 = vld [vmem:[#allocation2 + $0xc0] sm:$0xff]
        %v1218 = vld [vmem:[#allocation2 + $0xc8] sm:$0xff]
        %v1219 = vld [vmem:[#allocation2 + $0xd0] sm:$0xff]
        %v1220 = vld [vmem:[#allocation2 + $0xd8] sm:$0xff]
        %v1221 = vld [vmem:[#allocation2 + $0xe0] sm:$0xff]
        %v1222 = vld [vmem:[#allocation2 + $0xe8] sm:$0xff]
        %v1223 = vld [vmem:[#allocation2 + $0xf0] sm:$0xff]
        %v1224 = vld [vmem:[#allocation2 + $0xf8] sm:$0xff]
        %v1225 = vsel %vm1161, %v1062, 0.0
        %v1226 = vsel %vm1162, %v1063, 0.0
        %v1227 = vsel %vm1163, %v1064, 0.0
        %v1228 = vsel %vm1164, %v1065, 0.0
        %v1229 = vsel %vm1165, %v1066, 0.0
        %v1230 = vsel %vm1166, %v1067, 0.0
        %v1231 = vsel %vm1167, %v1068, 0.0
        %v1232 = vsel %vm1168, %v1069, 0.0
        %v1233 = vsel %vm1169, %v1070, 0.0
        %v1234 = vsel %vm1170, %v1071, 0.0
        %v1235 = vsel %vm1171, %v1072, 0.0
        %v1236 = vsel %vm1172, %v1073, 0.0
        %v1237 = vsel %vm1173, %v1074, 0.0
        %v1238 = vsel %vm1174, %v1075, 0.0
        %v1239 = vsel %vm1175, %v1076, 0.0
        %v1240 = vsel %vm1176, %v1077, 0.0
        %v1241 = vsel %vm1177, %v1078, 0.0
        %v1242 = vsel %vm1178, %v1079, 0.0
        %v1243 = vsel %vm1179, %v1080, 0.0
        %v1244 = vsel %vm1180, %v1081, 0.0
        %v1245 = vsel %vm1181, %v1082, 0.0
        %v1246 = vsel %vm1182, %v1083, 0.0
        %v1247 = vsel %vm1183, %v1084, 0.0
        %v1248 = vsel %vm1184, %v1085, 0.0
        %v1249 = vsel %vm1185, %v1086, 0.0
        %v1250 = vsel %vm1186, %v1087, 0.0
        %v1251 = vsel %vm1187, %v1088, 0.0
        %v1252 = vsel %vm1188, %v1089, 0.0
        %v1253 = vsel %vm1189, %v1090, 0.0
        %v1254 = vsel %vm1190, %v1091, 0.0
        %v1255 = vsel %vm1191, %v1092, 0.0
        %v1256 = vsel %vm1192, %v1093, 0.0
        %v1257 = vadd.f32 %v1193, %v1225
        %v1258 = vadd.f32 %v1194, %v1226
        %v1259 = vadd.f32 %v1195, %v1227
        %v1260 = vadd.f32 %v1196, %v1228
        %v1261 = vadd.f32 %v1197, %v1229
        %v1262 = vadd.f32 %v1198, %v1230
        %v1263 = vadd.f32 %v1199, %v1231
        %v1264 = vadd.f32 %v1200, %v1232
        %v1265 = vadd.f32 %v1201, %v1233
        %v1266 = vadd.f32 %v1202, %v1234
        %v1267 = vadd.f32 %v1203, %v1235
        %v1268 = vadd.f32 %v1204, %v1236
        %v1269 = vadd.f32 %v1205, %v1237
        %v1270 = vadd.f32 %v1206, %v1238
        %v1271 = vadd.f32 %v1207, %v1239
        %v1272 = vadd.f32 %v1208, %v1240
        %v1273 = vadd.f32 %v1209, %v1241
        %v1274 = vadd.f32 %v1210, %v1242
        %v1275 = vadd.f32 %v1211, %v1243
        %v1276 = vadd.f32 %v1212, %v1244
        %v1277 = vadd.f32 %v1213, %v1245
        %v1278 = vadd.f32 %v1214, %v1246
        %v1279 = vadd.f32 %v1215, %v1247
        %v1280 = vadd.f32 %v1216, %v1248
        %v1281 = vadd.f32 %v1217, %v1249
        %v1282 = vadd.f32 %v1218, %v1250
        %v1283 = vadd.f32 %v1219, %v1251
        %v1284 = vadd.f32 %v1220, %v1252
        %v1285 = vadd.f32 %v1221, %v1253
        %v1286 = vadd.f32 %v1222, %v1254
        %v1287 = vadd.f32 %v1223, %v1255
        %v1288 = vadd.f32 %v1224, %v1256
        %vm1289 = vcmask 7168
        %1290 = vst.msk [vmem:[#allocation2] sm:$0xff] %vm1289, %v1257
        %1291 = vst.msk [vmem:[#allocation2 + $0x8] sm:$0xff] %vm1289, %v1258
        %1292 = vst.msk [vmem:[#allocation2 + $0x10] sm:$0xff] %vm1289, %v1259
        %1293 = vst.msk [vmem:[#allocation2 + $0x18] sm:$0xff] %vm1289, %v1260
        %1294 = vst.msk [vmem:[#allocation2 + $0x20] sm:$0xff] %vm1289, %v1261
        %1295 = vst.msk [vmem:[#allocation2 + $0x28] sm:$0xff] %vm1289, %v1262
        %1296 = vst.msk [vmem:[#allocation2 + $0x30] sm:$0xff] %vm1289, %v1263
        %1297 = vst.msk [vmem:[#allocation2 + $0x38] sm:$0xff] %vm1289, %v1264
        %1298 = vst.msk [vmem:[#allocation2 + $0x40] sm:$0xff] %vm1289, %v1265
        %1299 = vst.msk [vmem:[#allocation2 + $0x48] sm:$0xff] %vm1289, %v1266
        %1300 = vst.msk [vmem:[#allocation2 + $0x50] sm:$0xff] %vm1289, %v1267
        %1301 = vst.msk [vmem:[#allocation2 + $0x58] sm:$0xff] %vm1289, %v1268
        %1302 = vst.msk [vmem:[#allocation2 + $0x60] sm:$0xff] %vm1289, %v1269
        %1303 = vst.msk [vmem:[#allocation2 + $0x68] sm:$0xff] %vm1289, %v1270
        %1304 = vst.msk [vmem:[#allocation2 + $0x70] sm:$0xff] %vm1289, %v1271
        %1305 = vst.msk [vmem:[#allocation2 + $0x78] sm:$0xff] %vm1289, %v1272
        %1306 = vst.msk [vmem:[#allocation2 + $0x80] sm:$0xff] %vm1289, %v1273
        %1307 = vst.msk [vmem:[#allocation2 + $0x88] sm:$0xff] %vm1289, %v1274
        %1308 = vst.msk [vmem:[#allocation2 + $0x90] sm:$0xff] %vm1289, %v1275
        %1309 = vst.msk [vmem:[#allocation2 + $0x98] sm:$0xff] %vm1289, %v1276
        %1310 = vst.msk [vmem:[#allocation2 + $0xa0] sm:$0xff] %vm1289, %v1277
        %1311 = vst.msk [vmem:[#allocation2 + $0xa8] sm:$0xff] %vm1289, %v1278
        %1312 = vst.msk [vmem:[#allocation2 + $0xb0] sm:$0xff] %vm1289, %v1279
        %1313 = vst.msk [vmem:[#allocation2 + $0xb8] sm:$0xff] %vm1289, %v1280
        %1314 = vst.msk [vmem:[#allocation2 + $0xc0] sm:$0xff] %vm1289, %v1281
        %1315 = vst.msk [vmem:[#allocation2 + $0xc8] sm:$0xff] %vm1289, %v1282
        %1316 = vst.msk [vmem:[#allocation2 + $0xd0] sm:$0xff] %vm1289, %v1283
        %1317 = vst.msk [vmem:[#allocation2 + $0xd8] sm:$0xff] %vm1289, %v1284
        %1318 = vst.msk [vmem:[#allocation2 + $0xe0] sm:$0xff] %vm1289, %v1285
        %1319 = vst.msk [vmem:[#allocation2 + $0xe8] sm:$0xff] %vm1289, %v1286
        %1320 = vst.msk [vmem:[#allocation2 + $0xf0] sm:$0xff] %vm1289, %v1287
        %1321 = vst.msk [vmem:[#allocation2 + $0xf8] sm:$0xff] %vm1289, %v1288
        %v1322 = vmul.f32 %v326, %v326
        %v1323 = vmul.f32 %v327, %v327
        %v1324 = vmul.f32 %v328, %v328
        %v1325 = vmul.f32 %v329, %v329
        %v1326 = vmul.f32 %v330, %v330
        %v1327 = vmul.f32 %v331, %v331
        %v1328 = vmul.f32 %v332, %v332
        %v1329 = vmul.f32 %v333, %v333
        %v1330 = vmul.f32 %v334, %v334
        %v1331 = vmul.f32 %v335, %v335
        %v1332 = vmul.f32 %v336, %v336
        %v1333 = vmul.f32 %v337, %v337
        %v1334 = vmul.f32 %v338, %v338
        %v1335 = vmul.f32 %v339, %v339
        %v1336 = vmul.f32 %v340, %v340
        %v1337 = vmul.f32 %v341, %v341
        %v1338 = vmul.f32 %v342, %v342
        %v1339 = vmul.f32 %v343, %v343
        %v1340 = vmul.f32 %v344, %v344
        %v1341 = vmul.f32 %v345, %v345
        %v1342 = vmul.f32 %v346, %v346
        %v1343 = vmul.f32 %v347, %v347
        %v1344 = vmul.f32 %v348, %v348
        %v1345 = vmul.f32 %v349, %v349
        %v1346 = vmul.f32 %v350, %v350
        %v1347 = vmul.f32 %v351, %v351
        %v1348 = vmul.f32 %v352, %v352
        %v1349 = vmul.f32 %v353, %v353
        %v1350 = vmul.f32 %v354, %v354
        %v1351 = vmul.f32 %v355, %v355
        %v1352 = vmul.f32 %v356, %v356
        %v1353 = vmul.f32 %v357, %v357
        %v1354 = vmul.f32 %v358, %v358
        %v1355 = vmul.f32 %v359, %v359
        %v1356 = vmul.f32 %v360, %v360
        %v1357 = vmul.f32 %v361, %v361
        %v1358 = vmul.f32 %v362, %v362
        %v1359 = vmul.f32 %v363, %v363
        %v1360 = vmul.f32 %v364, %v364
        %v1361 = vmul.f32 %v365, %v365
        %v1362 = vmul.f32 %v366, %v366
        %v1363 = vmul.f32 %v367, %v367
        %v1364 = vmul.f32 %v368, %v368
        %v1365 = vmul.f32 %v369, %v369
        %v1366 = vmul.f32 %v370, %v370
        %v1367 = vmul.f32 %v371, %v371
        %v1368 = vmul.f32 %v372, %v372
        %v1369 = vmul.f32 %v373, %v373
        %v1370 = vmul.f32 %v374, %v374
        %v1371 = vmul.f32 %v375, %v375
        %v1372 = vmul.f32 %v376, %v376
        %v1373 = vmul.f32 %v377, %v377
        %v1374 = vmul.f32 %v378, %v378
        %v1375 = vmul.f32 %v379, %v379
        %v1376 = vmul.f32 %v380, %v380
        %v1377 = vmul.f32 %v381, %v381
        %v1378 = vmul.f32 %v382, %v382
        %v1379 = vmul.f32 %v383, %v383
        %v1380 = vmul.f32 %v384, %v384
        %v1381 = vmul.f32 %v385, %v385
        %v1382 = vmul.f32 %v386, %v386
        %v1383 = vmul.f32 %v387, %v387
        %v1384 = vmul.f32 %v388, %v388
        %v1385 = vmul.f32 %v389, %v389
        %v1386 = vadd.f32 %v1322, %v1354
        %v1387 = vadd.f32 %v1323, %v1355
        %v1388 = vadd.f32 %v1324, %v1356
        %v1389 = vadd.f32 %v1325, %v1357
        %v1390 = vadd.f32 %v1326, %v1358
        %v1391 = vadd.f32 %v1327, %v1359
        %v1392 = vadd.f32 %v1328, %v1360
        %v1393 = vadd.f32 %v1329, %v1361
        %v1394 = vadd.f32 %v1330, %v1362
        %v1395 = vadd.f32 %v1331, %v1363
        %v1396 = vadd.f32 %v1332, %v1364
        %v1397 = vadd.f32 %v1333, %v1365
        %v1398 = vadd.f32 %v1334, %v1366
        %v1399 = vadd.f32 %v1335, %v1367
        %v1400 = vadd.f32 %v1336, %v1368
        %v1401 = vadd.f32 %v1337, %v1369
        %v1402 = vadd.f32 %v1338, %v1370
        %v1403 = vadd.f32 %v1339, %v1371
        %v1404 = vadd.f32 %v1340, %v1372
        %v1405 = vadd.f32 %v1341, %v1373
        %v1406 = vadd.f32 %v1342, %v1374
        %v1407 = vadd.f32 %v1343, %v1375
        %v1408 = vadd.f32 %v1344, %v1376
        %v1409 = vadd.f32 %v1345, %v1377
        %v1410 = vadd.f32 %v1346, %v1378
        %v1411 = vadd.f32 %v1347, %v1379
        %v1412 = vadd.f32 %v1348, %v1380
        %v1413 = vadd.f32 %v1349, %v1381
        %v1414 = vadd.f32 %v1350, %v1382
        %v1415 = vadd.f32 %v1351, %v1383
        %v1416 = vadd.f32 %v1352, %v1384
        %v1417 = vadd.f32 %v1353, %v1385
        %v1418 = vmul.f32 %v390, %v390
        %v1419 = vmul.f32 %v391, %v391
        %v1420 = vmul.f32 %v392, %v392
        %v1421 = vmul.f32 %v393, %v393
        %v1422 = vmul.f32 %v394, %v394
        %v1423 = vmul.f32 %v395, %v395
        %v1424 = vmul.f32 %v396, %v396
        %v1425 = vmul.f32 %v397, %v397
        %v1426 = vmul.f32 %v398, %v398
        %v1427 = vmul.f32 %v399, %v399
        %v1428 = vmul.f32 %v400, %v400
        %v1429 = vmul.f32 %v401, %v401
        %v1430 = vmul.f32 %v402, %v402
        %v1431 = vmul.f32 %v403, %v403
        %v1432 = vmul.f32 %v404, %v404
        %v1433 = vmul.f32 %v405, %v405
        %v1434 = vmul.f32 %v406, %v406
        %v1435 = vmul.f32 %v407, %v407
        %v1436 = vmul.f32 %v408, %v408
        %v1437 = vmul.f32 %v409, %v409
        %v1438 = vmul.f32 %v410, %v410
        %v1439 = vmul.f32 %v411, %v411
        %v1440 = vmul.f32 %v412, %v412
        %v1441 = vmul.f32 %v413, %v413
        %v1442 = vmul.f32 %v414, %v414
        %v1443 = vmul.f32 %v415, %v415
        %v1444 = vmul.f32 %v416, %v416
        %v1445 = vmul.f32 %v417, %v417
        %v1446 = vmul.f32 %v418, %v418
        %v1447 = vmul.f32 %v419, %v419
        %v1448 = vmul.f32 %v420, %v420
        %v1449 = vmul.f32 %v421, %v421
        %v1450 = vadd.f32 %v1386, %v1418
        %v1451 = vadd.f32 %v1387, %v1419
        %v1452 = vadd.f32 %v1388, %v1420
        %v1453 = vadd.f32 %v1389, %v1421
        %v1454 = vadd.f32 %v1390, %v1422
        %v1455 = vadd.f32 %v1391, %v1423
        %v1456 = vadd.f32 %v1392, %v1424
        %v1457 = vadd.f32 %v1393, %v1425
        %v1458 = vadd.f32 %v1394, %v1426
        %v1459 = vadd.f32 %v1395, %v1427
        %v1460 = vadd.f32 %v1396, %v1428
        %v1461 = vadd.f32 %v1397, %v1429
        %v1462 = vadd.f32 %v1398, %v1430
        %v1463 = vadd.f32 %v1399, %v1431
        %v1464 = vadd.f32 %v1400, %v1432
        %v1465 = vadd.f32 %v1401, %v1433
        %v1466 = vadd.f32 %v1402, %v1434
        %v1467 = vadd.f32 %v1403, %v1435
        %v1468 = vadd.f32 %v1404, %v1436
        %v1469 = vadd.f32 %v1405, %v1437
        %v1470 = vadd.f32 %v1406, %v1438
        %v1471 = vadd.f32 %v1407, %v1439
        %v1472 = vadd.f32 %v1408, %v1440
        %v1473 = vadd.f32 %v1409, %v1441
        %v1474 = vadd.f32 %v1410, %v1442
        %v1475 = vadd.f32 %v1411, %v1443
        %v1476 = vadd.f32 %v1412, %v1444
        %v1477 = vadd.f32 %v1413, %v1445
        %v1478 = vadd.f32 %v1414, %v1446
        %v1479 = vadd.f32 %v1415, %v1447
        %v1480 = vadd.f32 %v1416, %v1448
        %v1481 = vadd.f32 %v1417, %v1449
        %1482 = vadd.xlane.f32.xlu0 %v1450
        %v1483 = vpop.xlane.xlu0 %1482
        %1484 = vadd.xlane.f32.xlu0 %v1451
        %v1485 = vpop.xlane.xlu0 %1484
        %1486 = vadd.xlane.f32.xlu0 %v1452
        %v1487 = vpop.xlane.xlu0 %1486
        %1488 = vadd.xlane.f32.xlu0 %v1453
        %v1489 = vpop.xlane.xlu0 %1488
        %1490 = vadd.xlane.f32.xlu0 %v1454
        %v1491 = vpop.xlane.xlu0 %1490
        %1492 = vadd.xlane.f32.xlu0 %v1455
        %v1493 = vpop.xlane.xlu0 %1492
        %1494 = vadd.xlane.f32.xlu0 %v1456
        %v1495 = vpop.xlane.xlu0 %1494
        %1496 = vadd.xlane.f32.xlu0 %v1457
        %v1497 = vpop.xlane.xlu0 %1496
        %1498 = vadd.xlane.f32.xlu0 %v1458
        %v1499 = vpop.xlane.xlu0 %1498
        %1500 = vadd.xlane.f32.xlu0 %v1459
        %v1501 = vpop.xlane.xlu0 %1500
        %1502 = vadd.xlane.f32.xlu0 %v1460
        %v1503 = vpop.xlane.xlu0 %1502
        %1504 = vadd.xlane.f32.xlu0 %v1461
        %v1505 = vpop.xlane.xlu0 %1504
        %1506 = vadd.xlane.f32.xlu0 %v1462
        %v1507 = vpop.xlane.xlu0 %1506
        %1508 = vadd.xlane.f32.xlu0 %v1463
        %v1509 = vpop.xlane.xlu0 %1508
        %1510 = vadd.xlane.f32.xlu0 %v1464
        %v1511 = vpop.xlane.xlu0 %1510
        %1512 = vadd.xlane.f32.xlu0 %v1465
        %v1513 = vpop.xlane.xlu0 %1512
        %1514 = vadd.xlane.f32.xlu0 %v1466
        %v1515 = vpop.xlane.xlu0 %1514
        %1516 = vadd.xlane.f32.xlu0 %v1467
        %v1517 = vpop.xlane.xlu0 %1516
        %1518 = vadd.xlane.f32.xlu0 %v1468
        %v1519 = vpop.xlane.xlu0 %1518
        %1520 = vadd.xlane.f32.xlu0 %v1469
        %v1521 = vpop.xlane.xlu0 %1520
        %1522 = vadd.xlane.f32.xlu0 %v1470
        %v1523 = vpop.xlane.xlu0 %1522
        %1524 = vadd.xlane.f32.xlu0 %v1471
        %v1525 = vpop.xlane.xlu0 %1524
        %1526 = vadd.xlane.f32.xlu0 %v1472
        %v1527 = vpop.xlane.xlu0 %1526
        %1528 = vadd.xlane.f32.xlu0 %v1473
        %v1529 = vpop.xlane.xlu0 %1528
        %1530 = vadd.xlane.f32.xlu0 %v1474
        %v1531 = vpop.xlane.xlu0 %1530
        %1532 = vadd.xlane.f32.xlu0 %v1475
        %v1533 = vpop.xlane.xlu0 %1532
        %1534 = vadd.xlane.f32.xlu0 %v1476
        %v1535 = vpop.xlane.xlu0 %1534
        %1536 = vadd.xlane.f32.xlu0 %v1477
        %v1537 = vpop.xlane.xlu0 %1536
        %1538 = vadd.xlane.f32.xlu0 %v1478
        %v1539 = vpop.xlane.xlu0 %1538
        %1540 = vadd.xlane.f32.xlu0 %v1479
        %v1541 = vpop.xlane.xlu0 %1540
        %1542 = vadd.xlane.f32.xlu0 %v1480
        %v1543 = vpop.xlane.xlu0 %1542
        %1544 = vadd.xlane.f32.xlu0 %v1481
        %v1545 = vpop.xlane.xlu0 %1544
        %v1546 = vld [vmem:[#allocation3] sm:$0xff]
        %v1547 = vld [vmem:[#allocation3 + $0x8] sm:$0xff]
        %v1548 = vld [vmem:[#allocation3 + $0x10] sm:$0xff]
        %v1549 = vld [vmem:[#allocation3 + $0x18] sm:$0xff]
        %v1550 = vld [vmem:[#allocation3 + $0x20] sm:$0xff]
        %v1551 = vld [vmem:[#allocation3 + $0x28] sm:$0xff]
        %v1552 = vld [vmem:[#allocation3 + $0x30] sm:$0xff]
        %v1553 = vld [vmem:[#allocation3 + $0x38] sm:$0xff]
        %v1554 = vld [vmem:[#allocation3 + $0x40] sm:$0xff]
        %v1555 = vld [vmem:[#allocation3 + $0x48] sm:$0xff]
        %v1556 = vld [vmem:[#allocation3 + $0x50] sm:$0xff]
        %v1557 = vld [vmem:[#allocation3 + $0x58] sm:$0xff]
        %v1558 = vld [vmem:[#allocation3 + $0x60] sm:$0xff]
        %v1559 = vld [vmem:[#allocation3 + $0x68] sm:$0xff]
        %v1560 = vld [vmem:[#allocation3 + $0x70] sm:$0xff]
        %v1561 = vld [vmem:[#allocation3 + $0x78] sm:$0xff]
        %v1562 = vld [vmem:[#allocation3 + $0x80] sm:$0xff]
        %v1563 = vld [vmem:[#allocation3 + $0x88] sm:$0xff]
        %v1564 = vld [vmem:[#allocation3 + $0x90] sm:$0xff]
        %v1565 = vld [vmem:[#allocation3 + $0x98] sm:$0xff]
        %v1566 = vld [vmem:[#allocation3 + $0xa0] sm:$0xff]
        %v1567 = vld [vmem:[#allocation3 + $0xa8] sm:$0xff]
        %v1568 = vld [vmem:[#allocation3 + $0xb0] sm:$0xff]
        %v1569 = vld [vmem:[#allocation3 + $0xb8] sm:$0xff]
        %v1570 = vld [vmem:[#allocation3 + $0xc0] sm:$0xff]
        %v1571 = vld [vmem:[#allocation3 + $0xc8] sm:$0xff]
        %v1572 = vld [vmem:[#allocation3 + $0xd0] sm:$0xff]
        %v1573 = vld [vmem:[#allocation3 + $0xd8] sm:$0xff]
        %v1574 = vld [vmem:[#allocation3 + $0xe0] sm:$0xff]
        %v1575 = vld [vmem:[#allocation3 + $0xe8] sm:$0xff]
        %v1576 = vld [vmem:[#allocation3 + $0xf0] sm:$0xff]
        %v1577 = vld [vmem:[#allocation3 + $0xf8] sm:$0xff]
        %v1578 = vsel %vm1161, %v1483, 0.0
        %v1579 = vsel %vm1162, %v1485, 0.0
        %v1580 = vsel %vm1163, %v1487, 0.0
        %v1581 = vsel %vm1164, %v1489, 0.0
        %v1582 = vsel %vm1165, %v1491, 0.0
        %v1583 = vsel %vm1166, %v1493, 0.0
        %v1584 = vsel %vm1167, %v1495, 0.0
        %v1585 = vsel %vm1168, %v1497, 0.0
        %v1586 = vsel %vm1169, %v1499, 0.0
        %v1587 = vsel %vm1170, %v1501, 0.0
        %v1588 = vsel %vm1171, %v1503, 0.0
        %v1589 = vsel %vm1172, %v1505, 0.0
        %v1590 = vsel %vm1173, %v1507, 0.0
        %v1591 = vsel %vm1174, %v1509, 0.0
        %v1592 = vsel %vm1175, %v1511, 0.0
        %v1593 = vsel %vm1176, %v1513, 0.0
        %v1594 = vsel %vm1177, %v1515, 0.0
        %v1595 = vsel %vm1178, %v1517, 0.0
        %v1596 = vsel %vm1179, %v1519, 0.0
        %v1597 = vsel %vm1180, %v1521, 0.0
        %v1598 = vsel %vm1181, %v1523, 0.0
        %v1599 = vsel %vm1182, %v1525, 0.0
        %v1600 = vsel %vm1183, %v1527, 0.0
        %v1601 = vsel %vm1184, %v1529, 0.0
        %v1602 = vsel %vm1185, %v1531, 0.0
        %v1603 = vsel %vm1186, %v1533, 0.0
        %v1604 = vsel %vm1187, %v1535, 0.0
        %v1605 = vsel %vm1188, %v1537, 0.0
        %v1606 = vsel %vm1189, %v1539, 0.0
        %v1607 = vsel %vm1190, %v1541, 0.0
        %v1608 = vsel %vm1191, %v1543, 0.0
        %v1609 = vsel %vm1192, %v1545, 0.0
        %v1610 = vadd.f32 %v1546, %v1578
        %v1611 = vadd.f32 %v1547, %v1579
        %v1612 = vadd.f32 %v1548, %v1580
        %v1613 = vadd.f32 %v1549, %v1581
        %v1614 = vadd.f32 %v1550, %v1582
        %v1615 = vadd.f32 %v1551, %v1583
        %v1616 = vadd.f32 %v1552, %v1584
        %v1617 = vadd.f32 %v1553, %v1585
        %v1618 = vadd.f32 %v1554, %v1586
        %v1619 = vadd.f32 %v1555, %v1587
        %v1620 = vadd.f32 %v1556, %v1588
        %v1621 = vadd.f32 %v1557, %v1589
        %v1622 = vadd.f32 %v1558, %v1590
        %v1623 = vadd.f32 %v1559, %v1591
        %v1624 = vadd.f32 %v1560, %v1592
        %v1625 = vadd.f32 %v1561, %v1593
        %v1626 = vadd.f32 %v1562, %v1594
        %v1627 = vadd.f32 %v1563, %v1595
        %v1628 = vadd.f32 %v1564, %v1596
        %v1629 = vadd.f32 %v1565, %v1597
        %v1630 = vadd.f32 %v1566, %v1598
        %v1631 = vadd.f32 %v1567, %v1599
        %v1632 = vadd.f32 %v1568, %v1600
        %v1633 = vadd.f32 %v1569, %v1601
        %v1634 = vadd.f32 %v1570, %v1602
        %v1635 = vadd.f32 %v1571, %v1603
        %v1636 = vadd.f32 %v1572, %v1604
        %v1637 = vadd.f32 %v1573, %v1605
        %v1638 = vadd.f32 %v1574, %v1606
        %v1639 = vadd.f32 %v1575, %v1607
        %v1640 = vadd.f32 %v1576, %v1608
        %v1641 = vadd.f32 %v1577, %v1609
        %1642 = vst.msk [vmem:[#allocation3] sm:$0xff] %vm1289, %v1610
        %1643 = vst.msk [vmem:[#allocation3 + $0x8] sm:$0xff] %vm1289, %v1611
        %1644 = vst.msk [vmem:[#allocation3 + $0x10] sm:$0xff] %vm1289, %v1612
        %1645 = vst.msk [vmem:[#allocation3 + $0x18] sm:$0xff] %vm1289, %v1613
        %1646 = vst.msk [vmem:[#allocation3 + $0x20] sm:$0xff] %vm1289, %v1614
        %1647 = vst.msk [vmem:[#allocation3 + $0x28] sm:$0xff] %vm1289, %v1615
        %1648 = vst.msk [vmem:[#allocation3 + $0x30] sm:$0xff] %vm1289, %v1616
        %1649 = vst.msk [vmem:[#allocation3 + $0x38] sm:$0xff] %vm1289, %v1617
        %1650 = vst.msk [vmem:[#allocation3 + $0x40] sm:$0xff] %vm1289, %v1618
        %1651 = vst.msk [vmem:[#allocation3 + $0x48] sm:$0xff] %vm1289, %v1619
        %1652 = vst.msk [vmem:[#allocation3 + $0x50] sm:$0xff] %vm1289, %v1620
        %1653 = vst.msk [vmem:[#allocation3 + $0x58] sm:$0xff] %vm1289, %v1621
        %1654 = vst.msk [vmem:[#allocation3 + $0x60] sm:$0xff] %vm1289, %v1622
        %1655 = vst.msk [vmem:[#allocation3 + $0x68] sm:$0xff] %vm1289, %v1623
        %1656 = vst.msk [vmem:[#allocation3 + $0x70] sm:$0xff] %vm1289, %v1624
        %1657 = vst.msk [vmem:[#allocation3 + $0x78] sm:$0xff] %vm1289, %v1625
        %1658 = vst.msk [vmem:[#allocation3 + $0x80] sm:$0xff] %vm1289, %v1626
        %1659 = vst.msk [vmem:[#allocation3 + $0x88] sm:$0xff] %vm1289, %v1627
        %1660 = vst.msk [vmem:[#allocation3 + $0x90] sm:$0xff] %vm1289, %v1628
        %1661 = vst.msk [vmem:[#allocation3 + $0x98] sm:$0xff] %vm1289, %v1629
        %1662 = vst.msk [vmem:[#allocation3 + $0xa0] sm:$0xff] %vm1289, %v1630
        %1663 = vst.msk [vmem:[#allocation3 + $0xa8] sm:$0xff] %vm1289, %v1631
        %1664 = vst.msk [vmem:[#allocation3 + $0xb0] sm:$0xff] %vm1289, %v1632
        %1665 = vst.msk [vmem:[#allocation3 + $0xb8] sm:$0xff] %vm1289, %v1633
        %1666 = vst.msk [vmem:[#allocation3 + $0xc0] sm:$0xff] %vm1289, %v1634
        %1667 = vst.msk [vmem:[#allocation3 + $0xc8] sm:$0xff] %vm1289, %v1635
        %1668 = vst.msk [vmem:[#allocation3 + $0xd0] sm:$0xff] %vm1289, %v1636
        %1669 = vst.msk [vmem:[#allocation3 + $0xd8] sm:$0xff] %vm1289, %v1637
        %1670 = vst.msk [vmem:[#allocation3 + $0xe0] sm:$0xff] %vm1289, %v1638
        %1671 = vst.msk [vmem:[#allocation3 + $0xe8] sm:$0xff] %vm1289, %v1639
        %1672 = vst.msk [vmem:[#allocation3 + $0xf0] sm:$0xff] %vm1289, %v1640
        %1673 = vst.msk [vmem:[#allocation3 + $0xf8] sm:$0xff] %vm1289, %v1641
        %p1674 = scmp.eq.s32.totalorder %s21, 1
        // Predicated region
        $region49: #{tpu_custom_call.1} parent=31 // pred_check
          %p1675 = pneg %p1674
        $region50: #{tpu_custom_call.1} parent=31 // pred_check_branch
          %1677 = sbr.rel (%p1675) target = $region52
        $region51: #{tpu_custom_call.1} parent=31 // pred_region
          %v1678 = vld [vmem:[#allocation2] sm:$0xff]
          %v1679 = vld [vmem:[#allocation2 + $0x8] sm:$0xff]
          %v1680 = vld [vmem:[#allocation2 + $0x10] sm:$0xff]
          %v1681 = vld [vmem:[#allocation2 + $0x18] sm:$0xff]
          %v1682 = vld [vmem:[#allocation2 + $0x20] sm:$0xff]
          %v1683 = vld [vmem:[#allocation2 + $0x28] sm:$0xff]
          %v1684 = vld [vmem:[#allocation2 + $0x30] sm:$0xff]
          %v1685 = vld [vmem:[#allocation2 + $0x38] sm:$0xff]
          %v1686 = vld [vmem:[#allocation2 + $0x40] sm:$0xff]
          %v1687 = vld [vmem:[#allocation2 + $0x48] sm:$0xff]
          %v1688 = vld [vmem:[#allocation2 + $0x50] sm:$0xff]
          %v1689 = vld [vmem:[#allocation2 + $0x58] sm:$0xff]
          %v1690 = vld [vmem:[#allocation2 + $0x60] sm:$0xff]
          %v1691 = vld [vmem:[#allocation2 + $0x68] sm:$0xff]
          %v1692 = vld [vmem:[#allocation2 + $0x70] sm:$0xff]
          %v1693 = vld [vmem:[#allocation2 + $0x78] sm:$0xff]
          %v1694 = vld [vmem:[#allocation2 + $0x80] sm:$0xff]
          %v1695 = vld [vmem:[#allocation2 + $0x88] sm:$0xff]
          %v1696 = vld [vmem:[#allocation2 + $0x90] sm:$0xff]
          %v1697 = vld [vmem:[#allocation2 + $0x98] sm:$0xff]
          %v1698 = vld [vmem:[#allocation2 + $0xa0] sm:$0xff]
          %v1699 = vld [vmem:[#allocation2 + $0xa8] sm:$0xff]
          %v1700 = vld [vmem:[#allocation2 + $0xb0] sm:$0xff]
          %v1701 = vld [vmem:[#allocation2 + $0xb8] sm:$0xff]
          %v1702 = vld [vmem:[#allocation2 + $0xc0] sm:$0xff]
          %v1703 = vld [vmem:[#allocation2 + $0xc8] sm:$0xff]
          %v1704 = vld [vmem:[#allocation2 + $0xd0] sm:$0xff]
          %v1705 = vld [vmem:[#allocation2 + $0xd8] sm:$0xff]
          %v1706 = vld [vmem:[#allocation2 + $0xe0] sm:$0xff]
          %v1707 = vld [vmem:[#allocation2 + $0xe8] sm:$0xff]
          %v1708 = vld [vmem:[#allocation2 + $0xf0] sm:$0xff]
          %v1709 = vld [vmem:[#allocation2 + $0xf8] sm:$0xff]
          %v1710 = vsel %vm1289, %v1678, 0.0
          %v1711 = vsel %vm1289, %v1679, 0.0
          %v1712 = vadd.f32 %v1710, %v1711
          %v1713 = vsel %vm1289, %v1680, 0.0
          %v1714 = vadd.f32 %v1712, %v1713
          %v1715 = vsel %vm1289, %v1681, 0.0
          %v1716 = vadd.f32 %v1714, %v1715
          %v1717 = vsel %vm1289, %v1682, 0.0
          %v1718 = vadd.f32 %v1716, %v1717
          %v1719 = vsel %vm1289, %v1683, 0.0
          %v1720 = vadd.f32 %v1718, %v1719
          %v1721 = vsel %vm1289, %v1684, 0.0
          %v1722 = vadd.f32 %v1720, %v1721
          %v1723 = vsel %vm1289, %v1685, 0.0
          %v1724 = vadd.f32 %v1722, %v1723
          %v1725 = vsel %vm1289, %v1686, 0.0
          %v1726 = vadd.f32 %v1724, %v1725
          %v1727 = vsel %vm1289, %v1687, 0.0
          %v1728 = vadd.f32 %v1726, %v1727
          %v1729 = vsel %vm1289, %v1688, 0.0
          %v1730 = vadd.f32 %v1728, %v1729
          %v1731 = vsel %vm1289, %v1689, 0.0
          %v1732 = vadd.f32 %v1730, %v1731
          %v1733 = vsel %vm1289, %v1690, 0.0
          %v1734 = vadd.f32 %v1732, %v1733
          %v1735 = vsel %vm1289, %v1691, 0.0
          %v1736 = vadd.f32 %v1734, %v1735
          %v1737 = vsel %vm1289, %v1692, 0.0
          %v1738 = vadd.f32 %v1736, %v1737
          %v1739 = vsel %vm1289, %v1693, 0.0
          %v1740 = vadd.f32 %v1738, %v1739
          %v1741 = vsel %vm1289, %v1694, 0.0
          %v1742 = vadd.f32 %v1740, %v1741
          %v1743 = vsel %vm1289, %v1695, 0.0
          %v1744 = vadd.f32 %v1742, %v1743
          %v1745 = vsel %vm1289, %v1696, 0.0
          %v1746 = vadd.f32 %v1744, %v1745
          %v1747 = vsel %vm1289, %v1697, 0.0
          %v1748 = vadd.f32 %v1746, %v1747
          %v1749 = vsel %vm1289, %v1698, 0.0
          %v1750 = vadd.f32 %v1748, %v1749
          %v1751 = vsel %vm1289, %v1699, 0.0
          %v1752 = vadd.f32 %v1750, %v1751
          %v1753 = vsel %vm1289, %v1700, 0.0
          %v1754 = vadd.f32 %v1752, %v1753
          %v1755 = vsel %vm1289, %v1701, 0.0
          %v1756 = vadd.f32 %v1754, %v1755
          %v1757 = vsel %vm1289, %v1702, 0.0
          %v1758 = vadd.f32 %v1756, %v1757
          %v1759 = vsel %vm1289, %v1703, 0.0
          %v1760 = vadd.f32 %v1758, %v1759
          %v1761 = vsel %vm1289, %v1704, 0.0
          %v1762 = vadd.f32 %v1760, %v1761
          %v1763 = vsel %vm1289, %v1705, 0.0
          %v1764 = vadd.f32 %v1762, %v1763
          %v1765 = vsel %vm1289, %v1706, 0.0
          %v1766 = vadd.f32 %v1764, %v1765
          %v1767 = vsel %vm1289, %v1707, 0.0
          %v1768 = vadd.f32 %v1766, %v1767
          %v1769 = vsel %vm1289, %v1708, 0.0
          %v1770 = vadd.f32 %v1768, %v1769
          %v1771 = vsel %vm1289, %v1709, 0.0
          %v1772 = vadd.f32 %v1770, %v1771
          %1773 = vadd.xlane.f32.xlu0 %v1772
          %v1774 = vpop.xlane.xlu0 %1773
          %v1775 = vrot.slane %v1774, 4
          %v1776 = vadd.f32 %v1774, %v1775
          %v1777 = vrot.slane %v1776, 2
          %v1778 = vadd.f32 %v1776, %v1777
          %v1779 = vrot.slane %v1778, 1
          %v1780 = vadd.f32 %v1778, %v1779
          %s1781 = vtos %v1780
          %s1782 = ssub.f32 0.0, %s1781
          %v1783 = vld [vmem:[#allocation3] sm:$0xff]
          %v1784 = vld [vmem:[#allocation3 + $0x8] sm:$0xff]
          %v1785 = vld [vmem:[#allocation3 + $0x10] sm:$0xff]
          %v1786 = vld [vmem:[#allocation3 + $0x18] sm:$0xff]
          %v1787 = vld [vmem:[#allocation3 + $0x20] sm:$0xff]
          %v1788 = vld [vmem:[#allocation3 + $0x28] sm:$0xff]
          %v1789 = vld [vmem:[#allocation3 + $0x30] sm:$0xff]
          %v1790 = vld [vmem:[#allocation3 + $0x38] sm:$0xff]
          %v1791 = vld [vmem:[#allocation3 + $0x40] sm:$0xff]
          %v1792 = vld [vmem:[#allocation3 + $0x48] sm:$0xff]
          %v1793 = vld [vmem:[#allocation3 + $0x50] sm:$0xff]
          %v1794 = vld [vmem:[#allocation3 + $0x58] sm:$0xff]
          %v1795 = vld [vmem:[#allocation3 + $0x60] sm:$0xff]
          %v1796 = vld [vmem:[#allocation3 + $0x68] sm:$0xff]
          %v1797 = vld [vmem:[#allocation3 + $0x70] sm:$0xff]
          %v1798 = vld [vmem:[#allocation3 + $0x78] sm:$0xff]
          %v1799 = vld [vmem:[#allocation3 + $0x80] sm:$0xff]
          %v1800 = vld [vmem:[#allocation3 + $0x88] sm:$0xff]
          %v1801 = vld [vmem:[#allocation3 + $0x90] sm:$0xff]
          %v1802 = vld [vmem:[#allocation3 + $0x98] sm:$0xff]
          %v1803 = vld [vmem:[#allocation3 + $0xa0] sm:$0xff]
          %v1804 = vld [vmem:[#allocation3 + $0xa8] sm:$0xff]
          %v1805 = vld [vmem:[#allocation3 + $0xb0] sm:$0xff]
          %v1806 = vld [vmem:[#allocation3 + $0xb8] sm:$0xff]
          %v1807 = vld [vmem:[#allocation3 + $0xc0] sm:$0xff]
          %v1808 = vld [vmem:[#allocation3 + $0xc8] sm:$0xff]
          %v1809 = vld [vmem:[#allocation3 + $0xd0] sm:$0xff]
          %v1810 = vld [vmem:[#allocation3 + $0xd8] sm:$0xff]
          %v1811 = vld [vmem:[#allocation3 + $0xe0] sm:$0xff]
          %v1812 = vld [vmem:[#allocation3 + $0xe8] sm:$0xff]
          %v1813 = vld [vmem:[#allocation3 + $0xf0] sm:$0xff]
          %v1814 = vld [vmem:[#allocation3 + $0xf8] sm:$0xff]
          %v1815 = vsel %vm1289, %v1783, 0.0
          %v1816 = vsel %vm1289, %v1784, 0.0
          %v1817 = vadd.f32 %v1815, %v1816
          %v1818 = vsel %vm1289, %v1785, 0.0
          %v1819 = vadd.f32 %v1817, %v1818
          %v1820 = vsel %vm1289, %v1786, 0.0
          %v1821 = vadd.f32 %v1819, %v1820
          %v1822 = vsel %vm1289, %v1787, 0.0
          %v1823 = vadd.f32 %v1821, %v1822
          %v1824 = vsel %vm1289, %v1788, 0.0
          %v1825 = vadd.f32 %v1823, %v1824
          %v1826 = vsel %vm1289, %v1789, 0.0
          %v1827 = vadd.f32 %v1825, %v1826
          %v1828 = vsel %vm1289, %v1790, 0.0
          %v1829 = vadd.f32 %v1827, %v1828
          %v1830 = vsel %vm1289, %v1791, 0.0
          %v1831 = vadd.f32 %v1829, %v1830
          %v1832 = vsel %vm1289, %v1792, 0.0
          %v1833 = vadd.f32 %v1831, %v1832
          %v1834 = vsel %vm1289, %v1793, 0.0
          %v1835 = vadd.f32 %v1833, %v1834
          %v1836 = vsel %vm1289, %v1794, 0.0
          %v1837 = vadd.f32 %v1835, %v1836
          %v1838 = vsel %vm1289, %v1795, 0.0
          %v1839 = vadd.f32 %v1837, %v1838
          %v1840 = vsel %vm1289, %v1796, 0.0
          %v1841 = vadd.f32 %v1839, %v1840
          %v1842 = vsel %vm1289, %v1797, 0.0
          %v1843 = vadd.f32 %v1841, %v1842
          %v1844 = vsel %vm1289, %v1798, 0.0
          %v1845 = vadd.f32 %v1843, %v1844
          %v1846 = vsel %vm1289, %v1799, 0.0
          %v1847 = vadd.f32 %v1845, %v1846
          %v1848 = vsel %vm1289, %v1800, 0.0
          %v1849 = vadd.f32 %v1847, %v1848
          %v1850 = vsel %vm1289, %v1801, 0.0
          %v1851 = vadd.f32 %v1849, %v1850
          %v1852 = vsel %vm1289, %v1802, 0.0
          %v1853 = vadd.f32 %v1851, %v1852
          %v1854 = vsel %vm1289, %v1803, 0.0
          %v1855 = vadd.f32 %v1853, %v1854
          %v1856 = vsel %vm1289, %v1804, 0.0
          %v1857 = vadd.f32 %v1855, %v1856
          %v1858 = vsel %vm1289, %v1805, 0.0
          %v1859 = vadd.f32 %v1857, %v1858
          %v1860 = vsel %vm1289, %v1806, 0.0
          %v1861 = vadd.f32 %v1859, %v1860
          %v1862 = vsel %vm1289, %v1807, 0.0
          %v1863 = vadd.f32 %v1861, %v1862
          %v1864 = vsel %vm1289, %v1808, 0.0
          %v1865 = vadd.f32 %v1863, %v1864
          %v1866 = vsel %vm1289, %v1809, 0.0
          %v1867 = vadd.f32 %v1865, %v1866
          %v1868 = vsel %vm1289, %v1810, 0.0
          %v1869 = vadd.f32 %v1867, %v1868
          %v1870 = vsel %vm1289, %v1811, 0.0
          %v1871 = vadd.f32 %v1869, %v1870
          %v1872 = vsel %vm1289, %v1812, 0.0
          %v1873 = vadd.f32 %v1871, %v1872
          %v1874 = vsel %vm1289, %v1813, 0.0
          %v1875 = vadd.f32 %v1873, %v1874
          %v1876 = vsel %vm1289, %v1814, 0.0
          %v1877 = vadd.f32 %v1875, %v1876
          %1878 = vadd.xlane.f32.xlu0 %v1877
          %v1879 = vpop.xlane.xlu0 %1878
          %v1880 = vrot.slane %v1879, 4
          %v1881 = vadd.f32 %v1879, %v1880
          %v1882 = vrot.slane %v1881, 2
          %v1883 = vadd.f32 %v1881, %v1882
          %v1884 = vrot.slane %v1883, 1
          %v1885 = vadd.f32 %v1883, %v1884
          %s1886 = vtos %v1885
          %s1887 = smul.f32 %s1886, 0.001
          %s1888 = sadd.f32 %s1782, %s1887
          %s1889 = scalar_lea.smem [#allocation10], 0
          %1890 = sst [smem:[%s1889]] %s1888
        $region52: #{tpu_custom_call.1} parent=31 // pred_fallthru
          _
        // Predicated region
        $region53: #{tpu_custom_call.1} parent=31 // pred_check
          %p1891 = pneg %p112
        $region54: #{tpu_custom_call.1} parent=31 // pred_check_branch
          %1893 = sbr.rel (%p1891) target = $region56
        $region55: #{tpu_custom_call.1} parent=31 // pred_region
          %s1895 = ssub.s32 16, 16
          %1896 = vsyncadd [#allocation6], %s1895
          %1899 = dma.smem_to_hbm [#allocation10], 16, %s3, [#allocation6]
        $region56: #{tpu_custom_call.1} parent=31 // pred_fallthru
          _
        // Predicated region
        $region57: #{tpu_custom_call.1} parent=31 // pred_check
          %p1900 = pneg %p112
        $region58: #{tpu_custom_call.1} parent=31 // pred_check_branch
          %1902 = sbr.rel (%p1900) target = $region60
        $region59: #{tpu_custom_call.1} parent=31 // pred_region
          %1903 = dma.done [#allocation6], 16
        $region60: #{tpu_custom_call.1} parent=31 // pred_fallthru
          _
        %1904 = sfence
      $region32: #{tpu_custom_call.1} parent=5 // pred_fallthru
        _
      %p1905 = scmp.le.s32.totalorder 2, %s16
      // Predicated region
      $region61: #{tpu_custom_call.1} parent=5 // pred_check
        %p1906 = pneg %p1905
      $region62: #{tpu_custom_call.1} parent=5 // pred_check_branch
        %1908 = sbr.rel (%p1906) target = $region64
      $region63: #{tpu_custom_call.1} parent=5 // pred_region
        %s1909 = ssub.s32 %s16, 2
      $region64: #{tpu_custom_call.1} parent=5 // pred_fallthru
        _
    $region6: #{tpu_custom_call.1} parent=1 // loop_footer
      %s20 = sadd.s32 1, %s16
    $region7: #{tpu_custom_call.1} parent=1 // loop_footer_branch
      %15 = sbr.rel target = $region3
    $region8: #{tpu_custom_call.1} parent=1 // loop_exit
      _
    %1910 = vsyncpa [#allocation5], 1
    %s1911 = scalar_lea.sflag [#allocation5], 1
    %1912 = vsyncpa %s1911, 1
    %1913 = vsyncpa [#allocation8], 1
    %s1914 = scalar_lea.sflag [#allocation8], 1
    %1915 = vsyncpa %s1914, 1
    %1916 = vsyncpa [#allocation6], 1
    %s1917 = scalar_lea.sflag [#allocation6], 1
    %1918 = vsyncpa %s1917, 1

</llo_original>
